<compile_context>
chip_gen: v5e
topology: v5e:2x2
jax: 0.10.0
libtpu: 0.0.40
codegen_flags: <defaults>
</compile_context>

<pallas_src>
import functools
import numpy as np
import jax
import jax.numpy as jnp
from jax import lax
from jax.experimental import pallas as pl
from jax.experimental.pallas import tpu as pltpu


# ------------------------------ helpers ------------------------------------ #

def _round_up(x, m):
    return ((x + m - 1) // m) * m


def _cdiv(a, b):
    return -(-a // b)


_VMEM_LIMIT_BYTES = 32 * 1024 * 1024     # explicit; safe on v5e/v6e/v7x


def _choose_tile_rows(m_rows, row_bytes, target_block_bytes):
    """Byte-budgeted row tile: multiple of 8 sublanes, >=2 grid steps if possible."""
    tm = max(8, (target_block_bytes // max(row_bytes, 1)) // 8 * 8)
    # Keep at least two grid steps when M allows it so the "parallel" grid axis
    # actually distributes across both TensorCores on v7x.
    tm = min(tm, _round_up(_cdiv(m_rows, 2), 8))
    return max(tm, 8)


# ------------------------------ kernels ------------------------------------ #

def _layernorm_kernel(x_ref, w_ref, b_ref, o_ref, *, eps):
    """Generic path: last dim of the block is the full normalized dim C."""
    x = x_ref[...].astype(jnp.float32)
    mu = jnp.mean(x, axis=-1, keepdims=True)
    xc = x - mu
    var = jnp.mean(xc * xc, axis=-1, keepdims=True)          # unbiased=False
    inv = lax.rsqrt(var + eps)                                # EUP, not VALU divide
    y = xc * inv * w_ref[...].astype(jnp.float32) + b_ref[...].astype(jnp.float32)
    o_ref[...] = y.astype(o_ref.dtype)


def _layernorm_packed_kernel(x_ref, w_ref, b_ref, seg_ref, o_ref, *, eps, c):
    """Lane-packed path: k = 128 // c logical rows per 128-lane row.

    seg_ref is a (128,128) block-diagonal ones matrix; x @ seg gives the
    per-segment sum broadcast across the lanes of that segment (each output row
    depends only on the same input row, so packed rows never mix).
    """
    x = x_ref[...].astype(jnp.float32)
    seg = seg_ref[...]
    inv_c = jnp.float32(1.0 / c)
    mu = jnp.dot(x, seg, preferred_element_type=jnp.float32,
                 precision=lax.Precision.HIGHEST) * inv_c
    xc = x - mu
    var = jnp.dot(xc * xc, seg, preferred_element_type=jnp.float32,
                  precision=lax.Precision.HIGHEST) * inv_c    # unbiased=False
    inv = lax.rsqrt(var + eps)
    y = xc * inv * w_ref[...].astype(jnp.float32) + b_ref[...].astype(jnp.float32)
    o_ref[...] = y.astype(o_ref.dtype)


# ------------------------------ wrapper ------------------------------------ #

def withbias_layernorm(x, weight, bias, *, eps=1e-5, target_block_bytes=2 << 20):
    """LayerNorm over the last axis of x (arbitrary leading shape)."""
    orig_shape = x.shape
    C = orig_shape[-1]
    M = int(np.prod(orig_shape[:-1])) if len(orig_shape) > 1 else 1
    itemsize = jnp.dtype(x.dtype).itemsize
    x2d = x.reshape(M, C)

    compiler_params = pltpu.CompilerParams(
        dimension_semantics=("parallel",),
        vmem_limit_bytes=_VMEM_LIMIT_BYTES)

    lane_pack = (C < 128) and (128 % C == 0) and (M % (128 // C) == 0)

    if lane_pack:
        # Pack k consecutive logical rows into one lane-dense 128-wide row.
        k = 128 // C
        m_rows = M // k
        xp = x2d.reshape(m_rows, 128)                 # contiguous -> free reshape
        wp = jnp.tile(weight.reshape(-1), k).reshape(1, 128)
        bp = jnp.tile(bias.reshape(-1), k).reshape(1, 128)
        lane = np.arange(128)
        seg = jnp.asarray(lane[:, None] // C == lane[None, :] // C,
                          dtype=jnp.float32)          # block-diagonal ones

        tm = _choose_tile_rows(m_rows, 128 * itemsize, target_block_bytes)
        out = pl.pallas_call(
            functools.partial(_layernorm_packed_kernel, eps=eps, c=C),
            out_shape=jax.ShapeDtypeStruct((m_rows, 128), x.dtype),
            grid_spec=pltpu.PrefetchScalarGridSpec(
                num_scalar_prefetch=0,
                grid=(_cdiv(m_rows, tm),),            # partial last block is masked
                in_specs=[
                    pl.BlockSpec((tm, 128), lambda i: (i, 0)),
                    pl.BlockSpec((1, 128), lambda i: (0, 0)),   # resident
                    pl.BlockSpec((1, 128), lambda i: (0, 0)),   # resident
                    pl.BlockSpec((128, 128), lambda i: (0, 0)), # resident
                ],
                out_specs=pl.BlockSpec((tm, 128), lambda i: (i, 0)),
            ),
            compiler_params=compiler_params,
        )(xp, wp, bp, seg)
        return out.reshape(orig_shape)

    # Generic path: full normalized dim per block, byte-budgeted row tile.
    w2d = weight.reshape(1, C)
    b2d = bias.reshape(1, C)
    tm = _choose_tile_rows(M, C * itemsize, target_block_bytes)
    out = pl.pallas_call(
        functools.partial(_layernorm_kernel, eps=eps),
        out_shape=jax.ShapeDtypeStruct((M, C), x.dtype),
        grid_spec=pltpu.PrefetchScalarGridSpec(
            num_scalar_prefetch=0,
            grid=(_cdiv(M, tm),),                     # partial last block is masked
            in_specs=[
                pl.BlockSpec((tm, C), lambda i: (i, 0)),
                pl.BlockSpec((1, C), lambda i: (0, 0)),         # resident
                pl.BlockSpec((1, C), lambda i: (0, 0)),         # resident
            ],
            out_specs=pl.BlockSpec((tm, C), lambda i: (i, 0)),
        ),
        compiler_params=compiler_params,
    )(x2d, w2d, b2d)
    return out.reshape(orig_shape)


# --------------------------- Pure-JAX reference ----------------------------- #

def layernorm_reference(x, weight, bias, eps=1e-5):
    xf = x.astype(jnp.float32)
    mu = jnp.mean(xf, axis=-1, keepdims=True)
    var = jnp.mean((xf - mu) ** 2, axis=-1, keepdims=True)
    y = (xf - mu) / jnp.sqrt(var + eps) * weight + bias
    return y.astype(x.dtype)


# ---------------------------------- Main ------------------------------------ #

if __name__ == "__main__":
    key = jax.random.PRNGKey(0)
    k1, k2, k3, k4, k5 = jax.random.split(key, 5)

    # Main case: (B, H, W, C) = (2, 16, 16, 64) -> lane-packed path (k=2).
    B, H, W, C = 2, 16, 16, 64
    x = jax.random.normal(k1, (B, H, W, C), jnp.float32)
    weight = 1.0 + 0.1 * jax.random.normal(k2, (C,), jnp.float32)
    bias = 0.1 * jax.random.normal(k3, (C,), jnp.float32)

    out = jax.block_until_ready(withbias_layernorm(x, weight, bias))
    assert out.shape == x.shape, out.shape
    ref = jax.block_until_ready(layernorm_reference(x, weight, bias))
    np.testing.assert_allclose(np.asarray(out), np.asarray(ref),
                               rtol=1e-4, atol=1e-4)

    # Ragged generic case: C=48 (128 % C != 0), M=21 not a tile multiple
    # (exercises the masked partial last block on the generic path).
    x2 = jax.random.normal(k4, (3, 7, 48), jnp.float32)
    w2 = 1.0 + 0.05 * jax.random.normal(k2, (48,), jnp.float32)
    b2 = 0.05 * jax.random.normal(k3, (48,), jnp.float32)
    out2 = jax.block_until_ready(withbias_layernorm(x2, w2, b2))
    ref2 = jax.block_until_ready(layernorm_reference(x2, w2, b2))
    np.testing.assert_allclose(np.asarray(out2), np.asarray(ref2),
                               rtol=1e-4, atol=1e-4)

    # Packed path with a masked partial last block: M=30, k=2 -> 15 packed rows.
    x3 = jax.random.normal(k5, (10, 3, 64), jnp.float32)
    out3 = jax.block_until_ready(withbias_layernorm(x3, weight, bias))
    ref3 = jax.block_until_ready(layernorm_reference(x3, weight, bias))
    np.testing.assert_allclose(np.asarray(out3), np.asarray(ref3),
                               rtol=1e-4, atol=1e-4)

    print("KERNEL_OK")
</pallas_src>

<mosaic_0001>
module attributes {stable_mosaic.version = 11 : i64} {
  func.func @_layernorm_packed_kernel(%arg0: i32, %arg1: memref<128x128xf32, #tpu.memory_space<vmem>>, %arg2: memref<1x128xf32, #tpu.memory_space<vmem>>, %arg3: memref<1x128xf32, #tpu.memory_space<vmem>>, %arg4: memref<128x128xf32, #tpu.memory_space<vmem>>, %arg5: memref<128x128xf32, #tpu.memory_space<vmem>>) attributes {dimension_semantics = [#tpu.dimension_semantics<parallel>], iteration_bounds = array<i64: 2>, scalar_prefetch = 0 : i64, scratch_operands = 0 : i64, tpu.core_type = #tpu.core_type<tc>, window_params = [{transform_indices = @transform_0, window_bounds = array<i64: 128, 128>}, {pipeline_mode = #tpu.pipeline_mode<synchronous>, transform_indices = @transform_1, window_bounds = array<i64: 1, 128>}, {pipeline_mode = #tpu.pipeline_mode<synchronous>, transform_indices = @transform_2, window_bounds = array<i64: 1, 128>}, {pipeline_mode = #tpu.pipeline_mode<synchronous>, transform_indices = @transform_3, window_bounds = array<i64: 128, 128>}, {transform_indices = @transform_4, window_bounds = array<i64: 128, 128>}]} {
    %c0 = arith.constant 0 : index
    %c0_0 = arith.constant 0 : index
    %0 = vector.load %arg1[%c0, %c0_0] : memref<128x128xf32, #tpu.memory_space<vmem>>, vector<128x128xf32>
    %c0_1 = arith.constant 0 : index
    %c0_2 = arith.constant 0 : index
    %1 = vector.load %arg4[%c0_1, %c0_2] : memref<128x128xf32, #tpu.memory_space<vmem>>, vector<128x128xf32>
    %cst = arith.constant dense<0.000000e+00> : vector<128x128xf32>
    %2 = tpu.matmul %0, %1, %cst {dimension_numbers = #tpu.dot_dimension_numbers<[1], [0], [0], [1], [0, 0, 1, 1], [], []>, precision = #tpu.contract_precision<fp32>} : vector<128x128xf32>, vector<128x128xf32>, vector<128x128xf32> -> vector<128x128xf32>
    %cst_3 = arith.constant 1.562500e-02 : f32
    %3 = vector.broadcast %cst_3 : f32 to vector<128x128xf32>
    %4 = arith.mulf %2, %3 : vector<128x128xf32>
    %5 = arith.subf %0, %4 : vector<128x128xf32>
    %6 = arith.mulf %5, %5 : vector<128x128xf32>
    %cst_4 = arith.constant dense<0.000000e+00> : vector<128x128xf32>
    %7 = tpu.matmul %6, %1, %cst_4 {dimension_numbers = #tpu.dot_dimension_numbers<[1], [0], [0], [1], [0, 0, 1, 1], [], []>, precision = #tpu.contract_precision<fp32>} : vector<128x128xf32>, vector<128x128xf32>, vector<128x128xf32> -> vector<128x128xf32>
    %cst_5 = arith.constant 1.562500e-02 : f32
    %8 = vector.broadcast %cst_5 : f32 to vector<128x128xf32>
    %9 = arith.mulf %7, %8 : vector<128x128xf32>
    %cst_6 = arith.constant 9.99999974E-6 : f32
    %10 = vector.broadcast %cst_6 : f32 to vector<128x128xf32>
    %11 = arith.addf %9, %10 : vector<128x128xf32>
    %12 = math.rsqrt %11 : vector<128x128xf32>
    %13 = arith.mulf %5, %12 : vector<128x128xf32>
    %c0_7 = arith.constant 0 : index
    %c0_8 = arith.constant 0 : index
    %14 = vector.load %arg2[%c0_7, %c0_8] : memref<1x128xf32, #tpu.memory_space<vmem>>, vector<1x128xf32>
    %15 = vector.broadcast %14 : vector<1x128xf32> to vector<128x128xf32>
    %16 = arith.mulf %13, %15 : vector<128x128xf32>
    %c0_9 = arith.constant 0 : index
    %c0_10 = arith.constant 0 : index
    %17 = vector.load %arg3[%c0_9, %c0_10] : memref<1x128xf32, #tpu.memory_space<vmem>>, vector<1x128xf32>
    %18 = vector.broadcast %17 : vector<1x128xf32> to vector<128x128xf32>
    %19 = arith.addf %16, %18 : vector<128x128xf32>
    %c0_11 = arith.constant 0 : index
    %c0_12 = arith.constant 0 : index
    %20 = vector.load %arg5[%c0_11, %c0_12] : memref<128x128xf32, #tpu.memory_space<vmem>>, vector<128x128xf32>
    tpu.vector_store %arg5[%c0_11, %c0_12], %19 {strides = array<i32>} : memref<128x128xf32, #tpu.memory_space<vmem>>, vector<128x128xf32>,
    return
  }
  func.func @transform_0(%arg0: i32) -> (i32, i32) {
    %c0_i32 = arith.constant 0 : i32
    %c0_i32_0 = arith.constant 0 : i32
    return %arg0, %c0_i32 : i32, i32
  }
  func.func @transform_1(%arg0: i32) -> (i32, i32) {
    %c0_i32 = arith.constant 0 : i32
    %c0_i32_0 = arith.constant 0 : i32
    %c0_i32_1 = arith.constant 0 : i32
    return %c0_i32, %c0_i32_0 : i32, i32
  }
  func.func @transform_2(%arg0: i32) -> (i32, i32) {
    %c0_i32 = arith.constant 0 : i32
    %c0_i32_0 = arith.constant 0 : i32
    %c0_i32_1 = arith.constant 0 : i32
    return %c0_i32, %c0_i32_0 : i32, i32
  }
  func.func @transform_3(%arg0: i32) -> (i32, i32) {
    %c0_i32 = arith.constant 0 : i32
    %c0_i32_0 = arith.constant 0 : i32
    %c0_i32_1 = arith.constant 0 : i32
    return %c0_i32, %c0_i32_0 : i32, i32
  }
  func.func @transform_4(%arg0: i32) -> (i32, i32) {
    %c0_i32 = arith.constant 0 : i32
    %c0_i32_0 = arith.constant 0 : i32
    return %arg0, %c0_i32 : i32, i32
  }
}

</mosaic_0001>

<llo_original>
// kernel: tpu_custom_call.1
$region0: #{tpu_custom_call.1}
  #allocation0 [shape = 'u32[]', space=smem, size = 0x4, offset = 0x4, fixed_abs, tag = 'smem constant byte address 0x4 - core index']
  #allocation1 [shape = 'u32[72,128]{1,0:T(1,128)}', space=vmem, size = 0x9000, scoped, tag = 'internal scratch']
  %s0 = inlined_call_operand.hbm [shape: f32[256,128], index: 0, kind: input, shape index: {}]
  %s1 = inlined_call_operand.hbm [shape: f32[1,128], index: 1, kind: input, shape index: {}]
  %s2 = inlined_call_operand.vmem [shape: f32[1,128], index: 2, kind: input, shape index: {}]
  %s3 = inlined_call_operand.hbm [shape: f32[128,128], index: 3, kind: input, shape index: {}]
  %s4 = inlined_call_operand.hbm [shape: f32[256,128], index: 4, kind: output, shape index: {}]
  %s5 = sld [smem:[#allocation0]]
  $region61: #{tpu_custom_call.1} parent=0
    _
  %s7 = ssub.s32 1, %s5
  %s8 = scalar_select 0, %s7, %s5
  $region1: #{tpu_custom_call.1} parent=0
    #allocation2 [shape = 'u8[131072]{0}', space=vmem, size = 0x20000, scoped, tag = 'input window, operand 0']
    #allocation3 [shape = 's32[2]{0}', space=sflag, size = 0x8, scoped, tag = 'scoped memory for tpu_custom_call.1']
    #allocation4 [shape = 's32[2]{0}', space=sflag, size = 0x8, scoped, tag = 'scoped memory for tpu_custom_call.1']
    #allocation5 [shape = 'u8[512]{0}', space=vmem, size = 0x400, scoped, tag = 'input window, operand 1, single buffered']
    #allocation6 [shape = 's32[1]{0}', space=sflag, size = 0x4, scoped, tag = 'scoped memory for tpu_custom_call.1']
    #allocation7 [shape = 'u8[65536]{0}', space=vmem, size = 0x10000, scoped, tag = 'input window, operand 3, single buffered']
    #allocation8 [shape = 'u8[131072]{0}', space=vmem, size = 0x20000, scoped, tag = 'output window, operand 0']
    %9 = vsyncpa [#allocation3], 0
    %s10 = scalar_lea.sflag [#allocation3], 1
    %11 = vsyncpa %s10, 0
    %12 = vsyncpa [#allocation6], 0
    %13 = vsyncpa [#allocation4], 0
    %s14 = scalar_lea.sflag [#allocation4], 1
    %15 = vsyncpa %s14, 0
    loop: start=0, step=1, limit=4
    $region2: #{tpu_custom_call.1} parent=1 // loop_pre_header
      _
    $region3: #{tpu_custom_call.1} parent=1 // loop_header
      %s17 = sphi 0, %s21
      %p18 = scmp.ge.s32.totalorder %s17, 4
      %s27 = sphi 0, %s29
      %s30 = sphi 0, %s27
      %s31 = sphi 0, %s30
      %s47 = sphi 0, %s31
      %s51 = sphi 0, %s51
      %s53 = sphi 0, %s51
      %s54 = sphi 0, %s53
      %s68 = sphi 0, %s54
      %s72 = sphi 0, %s72
      %s74 = sphi 0, %s72
      %s75 = sphi 0, %s74
      %s89 = sphi 0, %s75
      %s93 = sphi 0, %s93
      %s95 = sphi 0, %s93
      %s96 = sphi 0, %s95
      %s110 = sphi 0, %s96
      %s116 = sphi 0, %s118
      %s119 = sphi 0, %s116
      %s120 = sphi 0, %s119
      %s136 = sphi 0, %s120
    $region4: #{tpu_custom_call.1} parent=1 // loop_header_branch
      %20 = sbr.rel (%p18) target = $region8
    $region5: #{tpu_custom_call.1} parent=1 // loop_body
      %s22 = ssub.s32 %s17, 1
      %s23 = ssub.s32 %s17, 2
      %s24 = sadd.s32 %s17, 1
      %s25 = ssub.s32 %s17, %s24
      %p26 = scmp.eq.s32.totalorder %s25, 0
      %s28 = sadd.s32 %s27, 1
      %s29 = scalar_select %p26, %s27, %s28
      %p32 = pneg %p26
      %p33 = scmp.eq.s32.totalorder %s17, 1
      %p34 = por %p32, %p33
      %p35 = scmp.ne.s32.totalorder %s27, %s30
      %p36 = scmp.eq.s32.totalorder %s17, 0
      %p37 = por %p35, %p36
      %p38 = scmp.ne.s32.totalorder %s27, %s30
      %p39 = scmp.eq.s32.totalorder %s22, 1
      %p40 = por %p38, %p39
      %p41 = scmp.ne.s32.totalorder %s30, %s31
      %p42 = scmp.eq.s32.totalorder %s22, 0
      %p43 = por %p41, %p42
      %p44 = scmp.ne.s32.totalorder %s30, %s31
      %p45 = scmp.eq.s32.totalorder %s23, 1
      %p46 = por %p44, %p45
      %p48 = scmp.ne.s32.totalorder %s31, %s47
      %p49 = scmp.eq.s32.totalorder %s23, 0
      %p50 = por %p48, %p49
      %s52 = sadd.s32 %s51, 1
      %p55 = scmp.eq.s32.totalorder %s17, 1
      %p56 = scmp.ne.s32.totalorder %s51, %s53
      %p57 = scmp.eq.s32.totalorder %s17, 0
      %p58 = por %p56, %p57
      %p59 = scmp.ne.s32.totalorder %s51, %s53
      %p60 = scmp.eq.s32.totalorder %s22, 1
      %p61 = por %p59, %p60
      %p62 = scmp.ne.s32.totalorder %s53, %s54
      %p63 = scmp.eq.s32.totalorder %s22, 0
      %p64 = por %p62, %p63
      %p65 = scmp.ne.s32.totalorder %s53, %s54
      %p66 = scmp.eq.s32.totalorder %s23, 1
      %p67 = por %p65, %p66
      %p69 = scmp.ne.s32.totalorder %s54, %s68
      %p70 = scmp.eq.s32.totalorder %s23, 0
      %p71 = por %p69, %p70
      %s73 = sadd.s32 %s72, 1
      %p76 = scmp.eq.s32.totalorder %s17, 1
      %p77 = scmp.ne.s32.totalorder %s72, %s74
      %p78 = scmp.eq.s32.totalorder %s17, 0
      %p79 = por %p77, %p78
      %p80 = scmp.ne.s32.totalorder %s72, %s74
      %p81 = scmp.eq.s32.totalorder %s22, 1
      %p82 = por %p80, %p81
      %p83 = scmp.ne.s32.totalorder %s74, %s75
      %p84 = scmp.eq.s32.totalorder %s22, 0
      %p85 = por %p83, %p84
      %p86 = scmp.ne.s32.totalorder %s74, %s75
      %p87 = scmp.eq.s32.totalorder %s23, 1
      %p88 = por %p86, %p87
      %p90 = scmp.ne.s32.totalorder %s75, %s89
      %p91 = scmp.eq.s32.totalorder %s23, 0
      %p92 = por %p90, %p91
      %s94 = sadd.s32 %s93, 1
      %p97 = scmp.eq.s32.totalorder %s17, 1
      %p98 = scmp.ne.s32.totalorder %s93, %s95
      %p99 = scmp.eq.s32.totalorder %s17, 0
      %p100 = por %p98, %p99
      %p101 = scmp.ne.s32.totalorder %s93, %s95
      %p102 = scmp.eq.s32.totalorder %s22, 1
      %p103 = por %p101, %p102
      %p104 = scmp.ne.s32.totalorder %s95, %s96
      %p105 = scmp.eq.s32.totalorder %s22, 0
      %p106 = por %p104, %p105
      %p107 = scmp.ne.s32.totalorder %s95, %s96
      %p108 = scmp.eq.s32.totalorder %s23, 1
      %p109 = por %p107, %p108
      %p111 = scmp.ne.s32.totalorder %s96, %s110
      %p112 = scmp.eq.s32.totalorder %s23, 0
      %p113 = por %p111, %p112
      %s114 = ssub.s32 %s17, %s24
      %p115 = scmp.eq.s32.totalorder %s114, 0
      %s117 = sadd.s32 %s116, 1
      %s118 = scalar_select %p115, %s116, %s117
      %p121 = pneg %p115
      %p122 = scmp.eq.s32.totalorder %s17, 1
      %p123 = por %p121, %p122
      %p124 = scmp.ne.s32.totalorder %s116, %s119
      %p125 = scmp.eq.s32.totalorder %s17, 0
      %p126 = por %p124, %p125
      %p127 = scmp.ne.s32.totalorder %s116, %s119
      %p128 = scmp.eq.s32.totalorder %s22, 1
      %p129 = por %p127, %p128
      %p130 = scmp.ne.s32.totalorder %s119, %s120
      %p131 = scmp.eq.s32.totalorder %s22, 0
      %p132 = por %p130, %p131
      %p133 = scmp.ne.s32.totalorder %s119, %s120
      %p134 = scmp.eq.s32.totalorder %s23, 1
      %p135 = por %p133, %p134
      %p137 = scmp.ne.s32.totalorder %s120, %s136
      %p138 = scmp.eq.s32.totalorder %s23, 0
      %p139 = por %p137, %p138
      %p140 = scmp.le.s32.totalorder 1, %s17
      %p141 = scmp.lt.s32.totalorder %s17, 3
      %p142 = pnand %p140, %p141
      %p143 = pneg %p142
      // Predicated region
      $region9: #{tpu_custom_call.1} parent=5 // pred_check
        _
      $region10: #{tpu_custom_call.1} parent=5 // pred_check_branch
        %145 = sbr.rel (%p142) target = $region12
      $region11: #{tpu_custom_call.1} parent=5 // pred_region
        %s146 = ssub.s32 %s17, 1
        // Predicated region
        $region13: #{tpu_custom_call.1} parent=11 // pred_check
          %p147 = pneg %p64
        $region14: #{tpu_custom_call.1} parent=11 // pred_check_branch
          %149 = sbr.rel (%p147) target = $region16
        $region15: #{tpu_custom_call.1} parent=11 // pred_region
          %151 = vsyncadd [#allocation6], 0
          %s153 = sshll.u32 %s1, 4
          %s154 = int_to_ptr.hbm [resolvable:$true] %s153
          %s155 = sshll.u32 [#allocation5], 4
          %s156 = int_to_ptr.vmem [resolvable:$true] %s155
          %158 = dma.hbm_to_vmem [thread:$0]  %s154, 16, %s156, [#allocation6]
        $region16: #{tpu_custom_call.1} parent=11 // pred_fallthru
          _
        // Predicated region
        $region17: #{tpu_custom_call.1} parent=11 // pred_check
          %p159 = pneg %p85
        $region18: #{tpu_custom_call.1} parent=11 // pred_check_branch
          %161 = sbr.rel (%p159) target = $region20
        $region19: #{tpu_custom_call.1} parent=11 // pred_region
          _
        $region20: #{tpu_custom_call.1} parent=11 // pred_fallthru
          _
        // Predicated region
        $region21: #{tpu_custom_call.1} parent=11 // pred_check
          %p162 = pneg %p106
        $region22: #{tpu_custom_call.1} parent=11 // pred_check_branch
          %164 = sbr.rel (%p162) target = $region24
        $region23: #{tpu_custom_call.1} parent=11 // pred_region
          %166 = vsyncadd [#allocation6], 0
          %s167 = sshll.u32 %s3, 4
          %s168 = int_to_ptr.hbm [resolvable:$true] %s167
          %s169 = sshll.u32 [#allocation7], 4
          %s170 = int_to_ptr.vmem [resolvable:$true] %s169
          %175 = dma.hbm_to_vmem [thread:$0]  %s168, 2048, %s170, [#allocation6], 128, 128, 8
        $region24: #{tpu_custom_call.1} parent=11 // pred_fallthru
          _
      $region12: #{tpu_custom_call.1} parent=5 // pred_fallthru
        _
      %p176 = scmp.lt.s32.totalorder %s17, 2
      // Predicated region
      $region25: #{tpu_custom_call.1} parent=5 // pred_check
        %p177 = pneg %p176
      $region26: #{tpu_custom_call.1} parent=5 // pred_check_branch
        %179 = sbr.rel (%p177) target = $region28
      $region27: #{tpu_custom_call.1} parent=5 // pred_region
        // Predicated region
        $region29: #{tpu_custom_call.1} parent=27 // pred_check
          %p180 = pneg %p37
        $region30: #{tpu_custom_call.1} parent=27 // pred_check_branch
          %182 = sbr.rel (%p180) target = $region32
        $region31: #{tpu_custom_call.1} parent=27 // pred_region
          %s183 = sand.u32 %s27, 1
          %s184 = scalar_lea.sflag [#allocation3], %s183
          %s185 = sand.u32 %s27, 1
          %s186 = smul.addr %s185, 128
          %s187 = scalar_lea.vmem [#allocation2], %s186
          %s188 = smul.u32 16, %s17
          %190 = vsyncadd %s184, 0
          %s191 = smul.addr %s188, 8
          %s192 = scalar_lea.hbm %s0, %s191
          %s193 = sshll.u32 %s192, 4
          %s194 = int_to_ptr.hbm [resolvable:$true] %s193
          %s195 = sshll.u32 %s187, 4
          %s196 = int_to_ptr.vmem [resolvable:$true] %s195
          %201 = dma.hbm_to_vmem [thread:$0]  %s194, 2048, %s196, %s184, 128, 128, 8
        $region32: #{tpu_custom_call.1} parent=27 // pred_fallthru
          _
      $region28: #{tpu_custom_call.1} parent=5 // pred_fallthru
        _
      %p202 = scmp.le.s32.totalorder 1, %s17
      %p203 = scmp.lt.s32.totalorder %s17, 3
      %p204 = pnand %p202, %p203
      %p205 = pneg %p204
      // Predicated region
      $region33: #{tpu_custom_call.1} parent=5 // pred_check
        _
      $region34: #{tpu_custom_call.1} parent=5 // pred_check_branch
        %207 = sbr.rel (%p204) target = $region36
      $region35: #{tpu_custom_call.1} parent=5 // pred_region
        %s208 = ssub.s32 %s17, 1
        %s209 = sand.u32 %s30, 1
        %s210 = scalar_lea.sflag [#allocation3], %s209
        %s211 = sand.u32 %s30, 1
        %s212 = smul.addr %s211, 128
        %s213 = scalar_lea.vmem [#allocation2], %s212
        // Predicated region
        $region37: #{tpu_custom_call.1} parent=35 // pred_check
          %p214 = pneg %p43
        $region38: #{tpu_custom_call.1} parent=35 // pred_check_branch
          %216 = sbr.rel (%p214) target = $region40
        $region39: #{tpu_custom_call.1} parent=35 // pred_region
          %218 = dma.done %s210, 2048
        $region40: #{tpu_custom_call.1} parent=35 // pred_fallthru
          _
        // Predicated region
        $region41: #{tpu_custom_call.1} parent=35 // pred_check
          %p219 = pneg %p64
        $region42: #{tpu_custom_call.1} parent=35 // pred_check_branch
          %221 = sbr.rel (%p219) target = $region44
        $region43: #{tpu_custom_call.1} parent=35 // pred_region
          %223 = dma.done [#allocation6], 16
        $region44: #{tpu_custom_call.1} parent=35 // pred_fallthru
          _
        // Predicated region
        $region45: #{tpu_custom_call.1} parent=35 // pred_check
          %p224 = pneg %p106
        $region46: #{tpu_custom_call.1} parent=35 // pred_check_branch
          %226 = sbr.rel (%p224) target = $region48
        $region47: #{tpu_custom_call.1} parent=35 // pred_region
          %228 = dma.done [#allocation6], 2048
        $region48: #{tpu_custom_call.1} parent=35 // pred_fallthru
          _
        %s229 = sand.u32 %s30, 1
        %s230 = scalar_lea.sflag [#allocation3], %s229
        %s231 = sand.u32 %s30, 1
        %s232 = smul.addr %s231, 128
        %s233 = scalar_lea.vmem [#allocation2], %s232
        %p234 = pneg %p43
        %p235 = pneg %p40
        %p236 = pneg %p64
        %p237 = pneg %p61
        %p238 = pneg %p85
        %p239 = pneg %p82
        %p240 = pneg %p106
        %p241 = pneg %p103
        %p242 = pneg %p132
        %p243 = pneg %p129
        %s244 = sand.u32 %s119, 1
        %s245 = scalar_lea.sflag [#allocation4], %s244
        %s246 = sand.u32 %s119, 1
        %s247 = smul.addr %s246, 128
        %s248 = scalar_lea.vmem [#allocation8], %s247
        %s249 = smul.u32 16, %s22
        %s250 = smul.u32 16, %s22
        %v251 = vld [vmem:[%s213] sm:$0xff]
        %v252 = vld [vmem:[%s213 + $0x8] sm:$0xff]
        %v253 = vld [vmem:[%s213 + $0x10] sm:$0xff]
        %v254 = vld [vmem:[%s213 + $0x18] sm:$0xff]
        %v255 = vld [vmem:[%s213 + $0x20] sm:$0xff]
        %v256 = vld [vmem:[%s213 + $0x28] sm:$0xff]
        %v257 = vld [vmem:[%s213 + $0x30] sm:$0xff]
        %v258 = vld [vmem:[%s213 + $0x38] sm:$0xff]
        %v259 = vld [vmem:[%s213 + $0x40] sm:$0xff]
        %v260 = vld [vmem:[%s213 + $0x48] sm:$0xff]
        %v261 = vld [vmem:[%s213 + $0x50] sm:$0xff]
        %v262 = vld [vmem:[%s213 + $0x58] sm:$0xff]
        %v263 = vld [vmem:[%s213 + $0x60] sm:$0xff]
        %v264 = vld [vmem:[%s213 + $0x68] sm:$0xff]
        %v265 = vld [vmem:[%s213 + $0x70] sm:$0xff]
        %v266 = vld [vmem:[%s213 + $0x78] sm:$0xff]
        %v267 = vld [vmem:[#allocation7] sm:$0xff]
        %v268 = vld [vmem:[#allocation7 + $0x8] sm:$0xff]
        %v269 = vld [vmem:[#allocation7 + $0x10] sm:$0xff]
        %v270 = vld [vmem:[#allocation7 + $0x18] sm:$0xff]
        %v271 = vld [vmem:[#allocation7 + $0x20] sm:$0xff]
        %v272 = vld [vmem:[#allocation7 + $0x28] sm:$0xff]
        %v273 = vld [vmem:[#allocation7 + $0x30] sm:$0xff]
        %v274 = vld [vmem:[#allocation7 + $0x38] sm:$0xff]
        %v275 = vld [vmem:[#allocation7 + $0x40] sm:$0xff]
        %v276 = vld [vmem:[#allocation7 + $0x48] sm:$0xff]
        %v277 = vld [vmem:[#allocation7 + $0x50] sm:$0xff]
        %v278 = vld [vmem:[#allocation7 + $0x58] sm:$0xff]
        %v279 = vld [vmem:[#allocation7 + $0x60] sm:$0xff]
        %v280 = vld [vmem:[#allocation7 + $0x68] sm:$0xff]
        %v281 = vld [vmem:[#allocation7 + $0x70] sm:$0xff]
        %v282 = vld [vmem:[#allocation7 + $0x78] sm:$0xff]
        %v283 = vand.u32 %v282, 4294901760
        %284 = vmatpush.msra.mxu0 %v283
        %v285 = vand.u32 %v281, 4294901760
        %286 = vmatpush.msra.mxu0 %v285
        %v287 = vand.u32 %v280, 4294901760
        %288 = vmatpush.msra.mxu0 %v287
        %v289 = vand.u32 %v279, 4294901760
        %290 = vmatpush.msra.mxu0 %v289
        %v291 = vand.u32 %v278, 4294901760
        %292 = vmatpush.msra.mxu0 %v291
        %v293 = vand.u32 %v277, 4294901760
        %294 = vmatpush.msra.mxu0 %v293
        %v295 = vand.u32 %v276, 4294901760
        %296 = vmatpush.msra.mxu0 %v295
        %v297 = vand.u32 %v275, 4294901760
        %298 = vmatpush.msra.mxu0 %v297
        %v299 = vand.u32 %v274, 4294901760
        %300 = vmatpush.msra.mxu0 %v299
        %v301 = vand.u32 %v273, 4294901760
        %302 = vmatpush.msra.mxu0 %v301
        %v303 = vand.u32 %v272, 4294901760
        %304 = vmatpush.msra.mxu0 %v303
        %v305 = vand.u32 %v271, 4294901760
        %306 = vmatpush.msra.mxu0 %v305
        %v307 = vand.u32 %v270, 4294901760
        %308 = vmatpush.msra.mxu0 %v307
        %v309 = vand.u32 %v269, 4294901760
        %310 = vmatpush.msra.mxu0 %v309
        %v311 = vand.u32 %v268, 4294901760
        %312 = vmatpush.msra.mxu0 %v311
        %v313 = vand.u32 %v267, 4294901760
        %314 = vmatpush.msra.mxu0 %v313
        %v315 = vand.u32 %v251, 4294901760
        %v316 = vsub.f32 %v251, %v315
        %v317 = vand.u32 %v316, 4294901760
        %v318 = vsub.f32 %v316, %v317
        %v319 = vand.u32 %v318, 4294901760
        %320 = vmatmul.f32.gmra.mxu0 %v319
        %v321 = vpop.f32.mrf.mxu0
        %v322 = vadd.f32 0.0, %v321
        %v323 = vand.u32 %v252, 4294901760
        %v324 = vsub.f32 %v252, %v323
        %v325 = vand.u32 %v324, 4294901760
        %v326 = vsub.f32 %v324, %v325
        %v327 = vand.u32 %v326, 4294901760
        %328 = vmatmul.f32.gmra.mxu0 %v327
        %v329 = vpop.f32.mrf.mxu0
        %v330 = vadd.f32 0.0, %v329
        %v331 = vand.u32 %v253, 4294901760
        %v332 = vsub.f32 %v253, %v331
        %v333 = vand.u32 %v332, 4294901760
        %v334 = vsub.f32 %v332, %v333
        %v335 = vand.u32 %v334, 4294901760
        %336 = vmatmul.f32.gmra.mxu0 %v335
        %v337 = vpop.f32.mrf.mxu0
        %v338 = vadd.f32 0.0, %v337
        %v339 = vand.u32 %v254, 4294901760
        %v340 = vsub.f32 %v254, %v339
        %v341 = vand.u32 %v340, 4294901760
        %v342 = vsub.f32 %v340, %v341
        %v343 = vand.u32 %v342, 4294901760
        %344 = vmatmul.f32.gmra.mxu0 %v343
        %v345 = vpop.f32.mrf.mxu0
        %v346 = vadd.f32 0.0, %v345
        %v347 = vand.u32 %v255, 4294901760
        %v348 = vsub.f32 %v255, %v347
        %v349 = vand.u32 %v348, 4294901760
        %v350 = vsub.f32 %v348, %v349
        %v351 = vand.u32 %v350, 4294901760
        %352 = vmatmul.f32.gmra.mxu0 %v351
        %v353 = vpop.f32.mrf.mxu0
        %v354 = vadd.f32 0.0, %v353
        %v355 = vand.u32 %v256, 4294901760
        %v356 = vsub.f32 %v256, %v355
        %v357 = vand.u32 %v356, 4294901760
        %v358 = vsub.f32 %v356, %v357
        %v359 = vand.u32 %v358, 4294901760
        %360 = vmatmul.f32.gmra.mxu0 %v359
        %v361 = vpop.f32.mrf.mxu0
        %v362 = vadd.f32 0.0, %v361
        %v363 = vand.u32 %v257, 4294901760
        %v364 = vsub.f32 %v257, %v363
        %v365 = vand.u32 %v364, 4294901760
        %v366 = vsub.f32 %v364, %v365
        %v367 = vand.u32 %v366, 4294901760
        %368 = vmatmul.f32.gmra.mxu0 %v367
        %v369 = vpop.f32.mrf.mxu0
        %v370 = vadd.f32 0.0, %v369
        %v371 = vand.u32 %v258, 4294901760
        %v372 = vsub.f32 %v258, %v371
        %v373 = vand.u32 %v372, 4294901760
        %v374 = vsub.f32 %v372, %v373
        %v375 = vand.u32 %v374, 4294901760
        %376 = vmatmul.f32.gmra.mxu0 %v375
        %v377 = vpop.f32.mrf.mxu0
        %v378 = vadd.f32 0.0, %v377
        %v379 = vand.u32 %v259, 4294901760
        %v380 = vsub.f32 %v259, %v379
        %v381 = vand.u32 %v380, 4294901760
        %v382 = vsub.f32 %v380, %v381
        %v383 = vand.u32 %v382, 4294901760
        %384 = vmatmul.f32.gmra.mxu0 %v383
        %v385 = vpop.f32.mrf.mxu0
        %v386 = vadd.f32 0.0, %v385
        %v387 = vand.u32 %v260, 4294901760
        %v388 = vsub.f32 %v260, %v387
        %v389 = vand.u32 %v388, 4294901760
        %v390 = vsub.f32 %v388, %v389
        %v391 = vand.u32 %v390, 4294901760
        %392 = vmatmul.f32.gmra.mxu0 %v391
        %v393 = vpop.f32.mrf.mxu0
        %v394 = vadd.f32 0.0, %v393
        %v395 = vand.u32 %v261, 4294901760
        %v396 = vsub.f32 %v261, %v395
        %v397 = vand.u32 %v396, 4294901760
        %v398 = vsub.f32 %v396, %v397
        %v399 = vand.u32 %v398, 4294901760
        %400 = vmatmul.f32.gmra.mxu0 %v399
        %v401 = vpop.f32.mrf.mxu0
        %v402 = vadd.f32 0.0, %v401
        %v403 = vand.u32 %v262, 4294901760
        %v404 = vsub.f32 %v262, %v403
        %v405 = vand.u32 %v404, 4294901760
        %v406 = vsub.f32 %v404, %v405
        %v407 = vand.u32 %v406, 4294901760
        %408 = vmatmul.f32.gmra.mxu0 %v407
        %v409 = vpop.f32.mrf.mxu0
        %v410 = vadd.f32 0.0, %v409
        %v411 = vand.u32 %v263, 4294901760
        %v412 = vsub.f32 %v263, %v411
        %v413 = vand.u32 %v412, 4294901760
        %v414 = vsub.f32 %v412, %v413
        %v415 = vand.u32 %v414, 4294901760
        %416 = vmatmul.f32.gmra.mxu0 %v415
        %v417 = vpop.f32.mrf.mxu0
        %v418 = vadd.f32 0.0, %v417
        %v419 = vand.u32 %v264, 4294901760
        %v420 = vsub.f32 %v264, %v419
        %v421 = vand.u32 %v420, 4294901760
        %v422 = vsub.f32 %v420, %v421
        %v423 = vand.u32 %v422, 4294901760
        %424 = vmatmul.f32.gmra.mxu0 %v423
        %v425 = vpop.f32.mrf.mxu0
        %v426 = vadd.f32 0.0, %v425
        %v427 = vand.u32 %v265, 4294901760
        %v428 = vsub.f32 %v265, %v427
        %v429 = vand.u32 %v428, 4294901760
        %v430 = vsub.f32 %v428, %v429
        %v431 = vand.u32 %v430, 4294901760
        %432 = vmatmul.f32.gmra.mxu0 %v431
        %v433 = vpop.f32.mrf.mxu0
        %v434 = vadd.f32 0.0, %v433
        %v435 = vand.u32 %v266, 4294901760
        %v436 = vsub.f32 %v266, %v435
        %v437 = vand.u32 %v436, 4294901760
        %v438 = vsub.f32 %v436, %v437
        %v439 = vand.u32 %v438, 4294901760
        %440 = vmatmul.f32.gmra.mxu0 %v439
        %v441 = vpop.f32.mrf.mxu0
        %v442 = vadd.f32 0.0, %v441
        %443 = vdwg.mxu0
        %v444 = vand.u32 %v282, 4294901760
        %v445 = vsub.f32 %v282, %v444
        %v446 = vand.u32 %v445, 4294901760
        %v447 = vsub.f32 %v445, %v446
        %v448 = vand.u32 %v447, 4294901760
        %449 = vmatpush.msra.mxu0 %v448
        %v450 = vand.u32 %v281, 4294901760
        %v451 = vsub.f32 %v281, %v450
        %v452 = vand.u32 %v451, 4294901760
        %v453 = vsub.f32 %v451, %v452
        %v454 = vand.u32 %v453, 4294901760
        %455 = vmatpush.msra.mxu0 %v454
        %v456 = vand.u32 %v280, 4294901760
        %v457 = vsub.f32 %v280, %v456
        %v458 = vand.u32 %v457, 4294901760
        %v459 = vsub.f32 %v457, %v458
        %v460 = vand.u32 %v459, 4294901760
        %461 = vmatpush.msra.mxu0 %v460
        %v462 = vand.u32 %v279, 4294901760
        %v463 = vsub.f32 %v279, %v462
        %v464 = vand.u32 %v463, 4294901760
        %v465 = vsub.f32 %v463, %v464
        %v466 = vand.u32 %v465, 4294901760
        %467 = vmatpush.msra.mxu0 %v466
        %v468 = vand.u32 %v278, 4294901760
        %v469 = vsub.f32 %v278, %v468
        %v470 = vand.u32 %v469, 4294901760
        %v471 = vsub.f32 %v469, %v470
        %v472 = vand.u32 %v471, 4294901760
        %473 = vmatpush.msra.mxu0 %v472
        %v474 = vand.u32 %v277, 4294901760
        %v475 = vsub.f32 %v277, %v474
        %v476 = vand.u32 %v475, 4294901760
        %v477 = vsub.f32 %v475, %v476
        %v478 = vand.u32 %v477, 4294901760
        %479 = vmatpush.msra.mxu0 %v478
        %v480 = vand.u32 %v276, 4294901760
        %v481 = vsub.f32 %v276, %v480
        %v482 = vand.u32 %v481, 4294901760
        %v483 = vsub.f32 %v481, %v482
        %v484 = vand.u32 %v483, 4294901760
        %485 = vmatpush.msra.mxu0 %v484
        %v486 = vand.u32 %v275, 4294901760
        %v487 = vsub.f32 %v275, %v486
        %v488 = vand.u32 %v487, 4294901760
        %v489 = vsub.f32 %v487, %v488
        %v490 = vand.u32 %v489, 4294901760
        %491 = vmatpush.msra.mxu0 %v490
        %v492 = vand.u32 %v274, 4294901760
        %v493 = vsub.f32 %v274, %v492
        %v494 = vand.u32 %v493, 4294901760
        %v495 = vsub.f32 %v493, %v494
        %v496 = vand.u32 %v495, 4294901760
        %497 = vmatpush.msra.mxu0 %v496
        %v498 = vand.u32 %v273, 4294901760
        %v499 = vsub.f32 %v273, %v498
        %v500 = vand.u32 %v499, 4294901760
        %v501 = vsub.f32 %v499, %v500
        %v502 = vand.u32 %v501, 4294901760
        %503 = vmatpush.msra.mxu0 %v502
        %v504 = vand.u32 %v272, 4294901760
        %v505 = vsub.f32 %v272, %v504
        %v506 = vand.u32 %v505, 4294901760
        %v507 = vsub.f32 %v505, %v506
        %v508 = vand.u32 %v507, 4294901760
        %509 = vmatpush.msra.mxu0 %v508
        %v510 = vand.u32 %v271, 4294901760
        %v511 = vsub.f32 %v271, %v510
        %v512 = vand.u32 %v511, 4294901760
        %v513 = vsub.f32 %v511, %v512
        %v514 = vand.u32 %v513, 4294901760
        %515 = vmatpush.msra.mxu0 %v514
        %v516 = vand.u32 %v270, 4294901760
        %v517 = vsub.f32 %v270, %v516
        %v518 = vand.u32 %v517, 4294901760
        %v519 = vsub.f32 %v517, %v518
        %v520 = vand.u32 %v519, 4294901760
        %521 = vmatpush.msra.mxu0 %v520
        %v522 = vand.u32 %v269, 4294901760
        %v523 = vsub.f32 %v269, %v522
        %v524 = vand.u32 %v523, 4294901760
        %v525 = vsub.f32 %v523, %v524
        %v526 = vand.u32 %v525, 4294901760
        %527 = vmatpush.msra.mxu0 %v526
        %v528 = vand.u32 %v268, 4294901760
        %v529 = vsub.f32 %v268, %v528
        %v530 = vand.u32 %v529, 4294901760
        %v531 = vsub.f32 %v529, %v530
        %v532 = vand.u32 %v531, 4294901760
        %533 = vmatpush.msra.mxu0 %v532
        %v534 = vand.u32 %v267, 4294901760
        %v535 = vsub.f32 %v267, %v534
        %v536 = vand.u32 %v535, 4294901760
        %v537 = vsub.f32 %v535, %v536
        %v538 = vand.u32 %v537, 4294901760
        %539 = vmatpush.msra.mxu0 %v538
        %v540 = vand.u32 %v251, 4294901760
        %541 = vmatmul.f32.gmra.mxu0 %v540
        %v542 = vpop.f32.mrf.mxu0
        %v543 = vadd.f32 %v322, %v542
        %v544 = vand.u32 %v252, 4294901760
        %545 = vmatmul.f32.gmra.mxu0 %v544
        %v546 = vpop.f32.mrf.mxu0
        %v547 = vadd.f32 %v330, %v546
        %v548 = vand.u32 %v253, 4294901760
        %549 = vmatmul.f32.gmra.mxu0 %v548
        %v550 = vpop.f32.mrf.mxu0
        %v551 = vadd.f32 %v338, %v550
        %v552 = vand.u32 %v254, 4294901760
        %553 = vmatmul.f32.gmra.mxu0 %v552
        %v554 = vpop.f32.mrf.mxu0
        %v555 = vadd.f32 %v346, %v554
        %v556 = vand.u32 %v255, 4294901760
        %557 = vmatmul.f32.gmra.mxu0 %v556
        %v558 = vpop.f32.mrf.mxu0
        %v559 = vadd.f32 %v354, %v558
        %v560 = vand.u32 %v256, 4294901760
        %561 = vmatmul.f32.gmra.mxu0 %v560
        %v562 = vpop.f32.mrf.mxu0
        %v563 = vadd.f32 %v362, %v562
        %v564 = vand.u32 %v257, 4294901760
        %565 = vmatmul.f32.gmra.mxu0 %v564
        %v566 = vpop.f32.mrf.mxu0
        %v567 = vadd.f32 %v370, %v566
        %v568 = vand.u32 %v258, 4294901760
        %569 = vmatmul.f32.gmra.mxu0 %v568
        %v570 = vpop.f32.mrf.mxu0
        %v571 = vadd.f32 %v378, %v570
        %v572 = vand.u32 %v259, 4294901760
        %573 = vmatmul.f32.gmra.mxu0 %v572
        %v574 = vpop.f32.mrf.mxu0
        %v575 = vadd.f32 %v386, %v574
        %v576 = vand.u32 %v260, 4294901760
        %577 = vmatmul.f32.gmra.mxu0 %v576
        %v578 = vpop.f32.mrf.mxu0
        %v579 = vadd.f32 %v394, %v578
        %v580 = vand.u32 %v261, 4294901760
        %581 = vmatmul.f32.gmra.mxu0 %v580
        %v582 = vpop.f32.mrf.mxu0
        %v583 = vadd.f32 %v402, %v582
        %v584 = vand.u32 %v262, 4294901760
        %585 = vmatmul.f32.gmra.mxu0 %v584
        %v586 = vpop.f32.mrf.mxu0
        %v587 = vadd.f32 %v410, %v586
        %v588 = vand.u32 %v263, 4294901760
        %589 = vmatmul.f32.gmra.mxu0 %v588
        %v590 = vpop.f32.mrf.mxu0
        %v591 = vadd.f32 %v418, %v590
        %v592 = vand.u32 %v264, 4294901760
        %593 = vmatmul.f32.gmra.mxu0 %v592
        %v594 = vpop.f32.mrf.mxu0
        %v595 = vadd.f32 %v426, %v594
        %v596 = vand.u32 %v265, 4294901760
        %597 = vmatmul.f32.gmra.mxu0 %v596
        %v598 = vpop.f32.mrf.mxu0
        %v599 = vadd.f32 %v434, %v598
        %v600 = vand.u32 %v266, 4294901760
        %601 = vmatmul.f32.gmra.mxu0 %v600
        %v602 = vpop.f32.mrf.mxu0
        %v603 = vadd.f32 %v442, %v602
        %604 = vdwg.mxu0
        %v605 = vand.u32 %v282, 4294901760
        %v606 = vsub.f32 %v282, %v605
        %607 = vmatpush.msra.mxu0 %v606
        %v608 = vand.u32 %v281, 4294901760
        %v609 = vsub.f32 %v281, %v608
        %610 = vmatpush.msra.mxu0 %v609
        %v611 = vand.u32 %v280, 4294901760
        %v612 = vsub.f32 %v280, %v611
        %613 = vmatpush.msra.mxu0 %v612
        %v614 = vand.u32 %v279, 4294901760
        %v615 = vsub.f32 %v279, %v614
        %616 = vmatpush.msra.mxu0 %v615
        %v617 = vand.u32 %v278, 4294901760
        %v618 = vsub.f32 %v278, %v617
        %619 = vmatpush.msra.mxu0 %v618
        %v620 = vand.u32 %v277, 4294901760
        %v621 = vsub.f32 %v277, %v620
        %622 = vmatpush.msra.mxu0 %v621
        %v623 = vand.u32 %v276, 4294901760
        %v624 = vsub.f32 %v276, %v623
        %625 = vmatpush.msra.mxu0 %v624
        %v626 = vand.u32 %v275, 4294901760
        %v627 = vsub.f32 %v275, %v626
        %628 = vmatpush.msra.mxu0 %v627
        %v629 = vand.u32 %v274, 4294901760
        %v630 = vsub.f32 %v274, %v629
        %631 = vmatpush.msra.mxu0 %v630
        %v632 = vand.u32 %v273, 4294901760
        %v633 = vsub.f32 %v273, %v632
        %634 = vmatpush.msra.mxu0 %v633
        %v635 = vand.u32 %v272, 4294901760
        %v636 = vsub.f32 %v272, %v635
        %637 = vmatpush.msra.mxu0 %v636
        %v638 = vand.u32 %v271, 4294901760
        %v639 = vsub.f32 %v271, %v638
        %640 = vmatpush.msra.mxu0 %v639
        %v641 = vand.u32 %v270, 4294901760
        %v642 = vsub.f32 %v270, %v641
        %643 = vmatpush.msra.mxu0 %v642
        %v644 = vand.u32 %v269, 4294901760
        %v645 = vsub.f32 %v269, %v644
        %646 = vmatpush.msra.mxu0 %v645
        %v647 = vand.u32 %v268, 4294901760
        %v648 = vsub.f32 %v268, %v647
        %649 = vmatpush.msra.mxu0 %v648
        %v650 = vand.u32 %v267, 4294901760
        %v651 = vsub.f32 %v267, %v650
        %652 = vmatpush.msra.mxu0 %v651
        %v653 = vand.u32 %v251, 4294901760
        %v654 = vsub.f32 %v251, %v653
        %655 = vmatmul.f32.gmra.mxu0 %v654
        %v656 = vpop.f32.mrf.mxu0
        %v657 = vadd.f32 %v543, %v656
        %v658 = vand.u32 %v252, 4294901760
        %v659 = vsub.f32 %v252, %v658
        %660 = vmatmul.f32.gmra.mxu0 %v659
        %v661 = vpop.f32.mrf.mxu0
        %v662 = vadd.f32 %v547, %v661
        %v663 = vand.u32 %v253, 4294901760
        %v664 = vsub.f32 %v253, %v663
        %665 = vmatmul.f32.gmra.mxu0 %v664
        %v666 = vpop.f32.mrf.mxu0
        %v667 = vadd.f32 %v551, %v666
        %v668 = vand.u32 %v254, 4294901760
        %v669 = vsub.f32 %v254, %v668
        %670 = vmatmul.f32.gmra.mxu0 %v669
        %v671 = vpop.f32.mrf.mxu0
        %v672 = vadd.f32 %v555, %v671
        %v673 = vand.u32 %v255, 4294901760
        %v674 = vsub.f32 %v255, %v673
        %675 = vmatmul.f32.gmra.mxu0 %v674
        %v676 = vpop.f32.mrf.mxu0
        %v677 = vadd.f32 %v559, %v676
        %v678 = vand.u32 %v256, 4294901760
        %v679 = vsub.f32 %v256, %v678
        %680 = vmatmul.f32.gmra.mxu0 %v679
        %v681 = vpop.f32.mrf.mxu0
        %v682 = vadd.f32 %v563, %v681
        %v683 = vand.u32 %v257, 4294901760
        %v684 = vsub.f32 %v257, %v683
        %685 = vmatmul.f32.gmra.mxu0 %v684
        %v686 = vpop.f32.mrf.mxu0
        %v687 = vadd.f32 %v567, %v686
        %v688 = vand.u32 %v258, 4294901760
        %v689 = vsub.f32 %v258, %v688
        %690 = vmatmul.f32.gmra.mxu0 %v689
        %v691 = vpop.f32.mrf.mxu0
        %v692 = vadd.f32 %v571, %v691
        %v693 = vand.u32 %v259, 4294901760
        %v694 = vsub.f32 %v259, %v693
        %695 = vmatmul.f32.gmra.mxu0 %v694
        %v696 = vpop.f32.mrf.mxu0
        %v697 = vadd.f32 %v575, %v696
        %v698 = vand.u32 %v260, 4294901760
        %v699 = vsub.f32 %v260, %v698
        %700 = vmatmul.f32.gmra.mxu0 %v699
        %v701 = vpop.f32.mrf.mxu0
        %v702 = vadd.f32 %v579, %v701
        %v703 = vand.u32 %v261, 4294901760
        %v704 = vsub.f32 %v261, %v703
        %705 = vmatmul.f32.gmra.mxu0 %v704
        %v706 = vpop.f32.mrf.mxu0
        %v707 = vadd.f32 %v583, %v706
        %v708 = vand.u32 %v262, 4294901760
        %v709 = vsub.f32 %v262, %v708
        %710 = vmatmul.f32.gmra.mxu0 %v709
        %v711 = vpop.f32.mrf.mxu0
        %v712 = vadd.f32 %v587, %v711
        %v713 = vand.u32 %v263, 4294901760
        %v714 = vsub.f32 %v263, %v713
        %715 = vmatmul.f32.gmra.mxu0 %v714
        %v716 = vpop.f32.mrf.mxu0
        %v717 = vadd.f32 %v591, %v716
        %v718 = vand.u32 %v264, 4294901760
        %v719 = vsub.f32 %v264, %v718
        %720 = vmatmul.f32.gmra.mxu0 %v719
        %v721 = vpop.f32.mrf.mxu0
        %v722 = vadd.f32 %v595, %v721
        %v723 = vand.u32 %v265, 4294901760
        %v724 = vsub.f32 %v265, %v723
        %725 = vmatmul.f32.gmra.mxu0 %v724
        %v726 = vpop.f32.mrf.mxu0
        %v727 = vadd.f32 %v599, %v726
        %v728 = vand.u32 %v266, 4294901760
        %v729 = vsub.f32 %v266, %v728
        %730 = vmatmul.f32.gmra.mxu0 %v729
        %v731 = vpop.f32.mrf.mxu0
        %v732 = vadd.f32 %v603, %v731
        %733 = vdwg.mxu0
        %v734 = vand.u32 %v282, 4294901760
        %735 = vmatpush.msra.mxu0 %v734
        %v736 = vand.u32 %v281, 4294901760
        %737 = vmatpush.msra.mxu0 %v736
        %v738 = vand.u32 %v280, 4294901760
        %739 = vmatpush.msra.mxu0 %v738
        %v740 = vand.u32 %v279, 4294901760
        %741 = vmatpush.msra.mxu0 %v740
        %v742 = vand.u32 %v278, 4294901760
        %743 = vmatpush.msra.mxu0 %v742
        %v744 = vand.u32 %v277, 4294901760
        %745 = vmatpush.msra.mxu0 %v744
        %v746 = vand.u32 %v276, 4294901760
        %747 = vmatpush.msra.mxu0 %v746
        %v748 = vand.u32 %v275, 4294901760
        %749 = vmatpush.msra.mxu0 %v748
        %v750 = vand.u32 %v274, 4294901760
        %751 = vmatpush.msra.mxu0 %v750
        %v752 = vand.u32 %v273, 4294901760
        %753 = vmatpush.msra.mxu0 %v752
        %v754 = vand.u32 %v272, 4294901760
        %755 = vmatpush.msra.mxu0 %v754
        %v756 = vand.u32 %v271, 4294901760
        %757 = vmatpush.msra.mxu0 %v756
        %v758 = vand.u32 %v270, 4294901760
        %759 = vmatpush.msra.mxu0 %v758
        %v760 = vand.u32 %v269, 4294901760
        %761 = vmatpush.msra.mxu0 %v760
        %v762 = vand.u32 %v268, 4294901760
        %763 = vmatpush.msra.mxu0 %v762
        %v764 = vand.u32 %v267, 4294901760
        %765 = vmatpush.msra.mxu0 %v764
        %v766 = vand.u32 %v251, 4294901760
        %v767 = vsub.f32 %v251, %v766
        %v768 = vand.u32 %v767, 4294901760
        %769 = vmatmul.f32.gmra.mxu0 %v768
        %v770 = vpop.f32.mrf.mxu0
        %v771 = vadd.f32 %v657, %v770
        %v772 = vand.u32 %v252, 4294901760
        %v773 = vsub.f32 %v252, %v772
        %v774 = vand.u32 %v773, 4294901760
        %775 = vmatmul.f32.gmra.mxu0 %v774
        %v776 = vpop.f32.mrf.mxu0
        %v777 = vadd.f32 %v662, %v776
        %v778 = vand.u32 %v253, 4294901760
        %v779 = vsub.f32 %v253, %v778
        %v780 = vand.u32 %v779, 4294901760
        %781 = vmatmul.f32.gmra.mxu0 %v780
        %v782 = vpop.f32.mrf.mxu0
        %v783 = vadd.f32 %v667, %v782
        %v784 = vand.u32 %v254, 4294901760
        %v785 = vsub.f32 %v254, %v784
        %v786 = vand.u32 %v785, 4294901760
        %787 = vmatmul.f32.gmra.mxu0 %v786
        %v788 = vpop.f32.mrf.mxu0
        %v789 = vadd.f32 %v672, %v788
        %v790 = vand.u32 %v255, 4294901760
        %v791 = vsub.f32 %v255, %v790
        %v792 = vand.u32 %v791, 4294901760
        %793 = vmatmul.f32.gmra.mxu0 %v792
        %v794 = vpop.f32.mrf.mxu0
        %v795 = vadd.f32 %v677, %v794
        %v796 = vand.u32 %v256, 4294901760
        %v797 = vsub.f32 %v256, %v796
        %v798 = vand.u32 %v797, 4294901760
        %799 = vmatmul.f32.gmra.mxu0 %v798
        %v800 = vpop.f32.mrf.mxu0
        %v801 = vadd.f32 %v682, %v800
        %v802 = vand.u32 %v257, 4294901760
        %v803 = vsub.f32 %v257, %v802
        %v804 = vand.u32 %v803, 4294901760
        %805 = vmatmul.f32.gmra.mxu0 %v804
        %v806 = vpop.f32.mrf.mxu0
        %v807 = vadd.f32 %v687, %v806
        %v808 = vand.u32 %v258, 4294901760
        %v809 = vsub.f32 %v258, %v808
        %v810 = vand.u32 %v809, 4294901760
        %811 = vmatmul.f32.gmra.mxu0 %v810
        %v812 = vpop.f32.mrf.mxu0
        %v813 = vadd.f32 %v692, %v812
        %v814 = vand.u32 %v259, 4294901760
        %v815 = vsub.f32 %v259, %v814
        %v816 = vand.u32 %v815, 4294901760
        %817 = vmatmul.f32.gmra.mxu0 %v816
        %v818 = vpop.f32.mrf.mxu0
        %v819 = vadd.f32 %v697, %v818
        %v820 = vand.u32 %v260, 4294901760
        %v821 = vsub.f32 %v260, %v820
        %v822 = vand.u32 %v821, 4294901760
        %823 = vmatmul.f32.gmra.mxu0 %v822
        %v824 = vpop.f32.mrf.mxu0
        %v825 = vadd.f32 %v702, %v824
        %v826 = vand.u32 %v261, 4294901760
        %v827 = vsub.f32 %v261, %v826
        %v828 = vand.u32 %v827, 4294901760
        %829 = vmatmul.f32.gmra.mxu0 %v828
        %v830 = vpop.f32.mrf.mxu0
        %v831 = vadd.f32 %v707, %v830
        %v832 = vand.u32 %v262, 4294901760
        %v833 = vsub.f32 %v262, %v832
        %v834 = vand.u32 %v833, 4294901760
        %835 = vmatmul.f32.gmra.mxu0 %v834
        %v836 = vpop.f32.mrf.mxu0
        %v837 = vadd.f32 %v712, %v836
        %v838 = vand.u32 %v263, 4294901760
        %v839 = vsub.f32 %v263, %v838
        %v840 = vand.u32 %v839, 4294901760
        %841 = vmatmul.f32.gmra.mxu0 %v840
        %v842 = vpop.f32.mrf.mxu0
        %v843 = vadd.f32 %v717, %v842
        %v844 = vand.u32 %v264, 4294901760
        %v845 = vsub.f32 %v264, %v844
        %v846 = vand.u32 %v845, 4294901760
        %847 = vmatmul.f32.gmra.mxu0 %v846
        %v848 = vpop.f32.mrf.mxu0
        %v849 = vadd.f32 %v722, %v848
        %v850 = vand.u32 %v265, 4294901760
        %v851 = vsub.f32 %v265, %v850
        %v852 = vand.u32 %v851, 4294901760
        %853 = vmatmul.f32.gmra.mxu0 %v852
        %v854 = vpop.f32.mrf.mxu0
        %v855 = vadd.f32 %v727, %v854
        %v856 = vand.u32 %v266, 4294901760
        %v857 = vsub.f32 %v266, %v856
        %v858 = vand.u32 %v857, 4294901760
        %859 = vmatmul.f32.gmra.mxu0 %v858
        %v860 = vpop.f32.mrf.mxu0
        %v861 = vadd.f32 %v732, %v860
        %862 = vdwg.mxu0
        %v863 = vand.u32 %v282, 4294901760
        %v864 = vsub.f32 %v282, %v863
        %v865 = vand.u32 %v864, 4294901760
        %866 = vmatpush.msra.mxu0 %v865
        %v867 = vand.u32 %v281, 4294901760
        %v868 = vsub.f32 %v281, %v867
        %v869 = vand.u32 %v868, 4294901760
        %870 = vmatpush.msra.mxu0 %v869
        %v871 = vand.u32 %v280, 4294901760
        %v872 = vsub.f32 %v280, %v871
        %v873 = vand.u32 %v872, 4294901760
        %874 = vmatpush.msra.mxu0 %v873
        %v875 = vand.u32 %v279, 4294901760
        %v876 = vsub.f32 %v279, %v875
        %v877 = vand.u32 %v876, 4294901760
        %878 = vmatpush.msra.mxu0 %v877
        %v879 = vand.u32 %v278, 4294901760
        %v880 = vsub.f32 %v278, %v879
        %v881 = vand.u32 %v880, 4294901760
        %882 = vmatpush.msra.mxu0 %v881
        %v883 = vand.u32 %v277, 4294901760
        %v884 = vsub.f32 %v277, %v883
        %v885 = vand.u32 %v884, 4294901760
        %886 = vmatpush.msra.mxu0 %v885
        %v887 = vand.u32 %v276, 4294901760
        %v888 = vsub.f32 %v276, %v887
        %v889 = vand.u32 %v888, 4294901760
        %890 = vmatpush.msra.mxu0 %v889
        %v891 = vand.u32 %v275, 4294901760
        %v892 = vsub.f32 %v275, %v891
        %v893 = vand.u32 %v892, 4294901760
        %894 = vmatpush.msra.mxu0 %v893
        %v895 = vand.u32 %v274, 4294901760
        %v896 = vsub.f32 %v274, %v895
        %v897 = vand.u32 %v896, 4294901760
        %898 = vmatpush.msra.mxu0 %v897
        %v899 = vand.u32 %v273, 4294901760
        %v900 = vsub.f32 %v273, %v899
        %v901 = vand.u32 %v900, 4294901760
        %902 = vmatpush.msra.mxu0 %v901
        %v903 = vand.u32 %v272, 4294901760
        %v904 = vsub.f32 %v272, %v903
        %v905 = vand.u32 %v904, 4294901760
        %906 = vmatpush.msra.mxu0 %v905
        %v907 = vand.u32 %v271, 4294901760
        %v908 = vsub.f32 %v271, %v907
        %v909 = vand.u32 %v908, 4294901760
        %910 = vmatpush.msra.mxu0 %v909
        %v911 = vand.u32 %v270, 4294901760
        %v912 = vsub.f32 %v270, %v911
        %v913 = vand.u32 %v912, 4294901760
        %914 = vmatpush.msra.mxu0 %v913
        %v915 = vand.u32 %v269, 4294901760
        %v916 = vsub.f32 %v269, %v915
        %v917 = vand.u32 %v916, 4294901760
        %918 = vmatpush.msra.mxu0 %v917
        %v919 = vand.u32 %v268, 4294901760
        %v920 = vsub.f32 %v268, %v919
        %v921 = vand.u32 %v920, 4294901760
        %922 = vmatpush.msra.mxu0 %v921
        %v923 = vand.u32 %v267, 4294901760
        %v924 = vsub.f32 %v267, %v923
        %v925 = vand.u32 %v924, 4294901760
        %926 = vmatpush.msra.mxu0 %v925
        %v927 = vand.u32 %v251, 4294901760
        %928 = vmatmul.f32.gmra.mxu0 %v927
        %v929 = vpop.f32.mrf.mxu0
        %v930 = vadd.f32 %v771, %v929
        %v931 = vand.u32 %v252, 4294901760
        %932 = vmatmul.f32.gmra.mxu0 %v931
        %v933 = vpop.f32.mrf.mxu0
        %v934 = vadd.f32 %v777, %v933
        %v935 = vand.u32 %v253, 4294901760
        %936 = vmatmul.f32.gmra.mxu0 %v935
        %v937 = vpop.f32.mrf.mxu0
        %v938 = vadd.f32 %v783, %v937
        %v939 = vand.u32 %v254, 4294901760
        %940 = vmatmul.f32.gmra.mxu0 %v939
        %v941 = vpop.f32.mrf.mxu0
        %v942 = vadd.f32 %v789, %v941
        %v943 = vand.u32 %v255, 4294901760
        %944 = vmatmul.f32.gmra.mxu0 %v943
        %v945 = vpop.f32.mrf.mxu0
        %v946 = vadd.f32 %v795, %v945
        %v947 = vand.u32 %v256, 4294901760
        %948 = vmatmul.f32.gmra.mxu0 %v947
        %v949 = vpop.f32.mrf.mxu0
        %v950 = vadd.f32 %v801, %v949
        %v951 = vand.u32 %v257, 4294901760
        %952 = vmatmul.f32.gmra.mxu0 %v951
        %v953 = vpop.f32.mrf.mxu0
        %v954 = vadd.f32 %v807, %v953
        %v955 = vand.u32 %v258, 4294901760
        %956 = vmatmul.f32.gmra.mxu0 %v955
        %v957 = vpop.f32.mrf.mxu0
        %v958 = vadd.f32 %v813, %v957
        %v959 = vand.u32 %v259, 4294901760
        %960 = vmatmul.f32.gmra.mxu0 %v959
        %v961 = vpop.f32.mrf.mxu0
        %v962 = vadd.f32 %v819, %v961
        %v963 = vand.u32 %v260, 4294901760
        %964 = vmatmul.f32.gmra.mxu0 %v963
        %v965 = vpop.f32.mrf.mxu0
        %v966 = vadd.f32 %v825, %v965
        %v967 = vand.u32 %v261, 4294901760
        %968 = vmatmul.f32.gmra.mxu0 %v967
        %v969 = vpop.f32.mrf.mxu0
        %v970 = vadd.f32 %v831, %v969
        %v971 = vand.u32 %v262, 4294901760
        %972 = vmatmul.f32.gmra.mxu0 %v971
        %v973 = vpop.f32.mrf.mxu0
        %v974 = vadd.f32 %v837, %v973
        %v975 = vand.u32 %v263, 4294901760
        %976 = vmatmul.f32.gmra.mxu0 %v975
        %v977 = vpop.f32.mrf.mxu0
        %v978 = vadd.f32 %v843, %v977
        %v979 = vand.u32 %v264, 4294901760
        %980 = vmatmul.f32.gmra.mxu0 %v979
        %v981 = vpop.f32.mrf.mxu0
        %v982 = vadd.f32 %v849, %v981
        %v983 = vand.u32 %v265, 4294901760
        %984 = vmatmul.f32.gmra.mxu0 %v983
        %v985 = vpop.f32.mrf.mxu0
        %v986 = vadd.f32 %v855, %v985
        %v987 = vand.u32 %v266, 4294901760
        %988 = vmatmul.f32.gmra.mxu0 %v987
        %v989 = vpop.f32.mrf.mxu0
        %v990 = vadd.f32 %v861, %v989
        %991 = vdwg.mxu0
        %v992 = vand.u32 %v282, 4294901760
        %993 = vmatpush.msra.mxu0 %v992
        %v994 = vand.u32 %v281, 4294901760
        %995 = vmatpush.msra.mxu0 %v994
        %v996 = vand.u32 %v280, 4294901760
        %997 = vmatpush.msra.mxu0 %v996
        %v998 = vand.u32 %v279, 4294901760
        %999 = vmatpush.msra.mxu0 %v998
        %v1000 = vand.u32 %v278, 4294901760
        %1001 = vmatpush.msra.mxu0 %v1000
        %v1002 = vand.u32 %v277, 4294901760
        %1003 = vmatpush.msra.mxu0 %v1002
        %v1004 = vand.u32 %v276, 4294901760
        %1005 = vmatpush.msra.mxu0 %v1004
        %v1006 = vand.u32 %v275, 4294901760
        %1007 = vmatpush.msra.mxu0 %v1006
        %v1008 = vand.u32 %v274, 4294901760
        %1009 = vmatpush.msra.mxu0 %v1008
        %v1010 = vand.u32 %v273, 4294901760
        %1011 = vmatpush.msra.mxu0 %v1010
        %v1012 = vand.u32 %v272, 4294901760
        %1013 = vmatpush.msra.mxu0 %v1012
        %v1014 = vand.u32 %v271, 4294901760
        %1015 = vmatpush.msra.mxu0 %v1014
        %v1016 = vand.u32 %v270, 4294901760
        %1017 = vmatpush.msra.mxu0 %v1016
        %v1018 = vand.u32 %v269, 4294901760
        %1019 = vmatpush.msra.mxu0 %v1018
        %v1020 = vand.u32 %v268, 4294901760
        %1021 = vmatpush.msra.mxu0 %v1020
        %v1022 = vand.u32 %v267, 4294901760
        %1023 = vmatpush.msra.mxu0 %v1022
        %v1024 = vand.u32 %v251, 4294901760
        %1025 = vmatmul.f32.gmra.mxu0 %v1024
        %v1026 = vpop.f32.mrf.mxu0
        %v1027 = vadd.f32 %v930, %v1026
        %v1028 = vand.u32 %v252, 4294901760
        %1029 = vmatmul.f32.gmra.mxu0 %v1028
        %v1030 = vpop.f32.mrf.mxu0
        %v1031 = vadd.f32 %v934, %v1030
        %v1032 = vand.u32 %v253, 4294901760
        %1033 = vmatmul.f32.gmra.mxu0 %v1032
        %v1034 = vpop.f32.mrf.mxu0
        %v1035 = vadd.f32 %v938, %v1034
        %v1036 = vand.u32 %v254, 4294901760
        %1037 = vmatmul.f32.gmra.mxu0 %v1036
        %v1038 = vpop.f32.mrf.mxu0
        %v1039 = vadd.f32 %v942, %v1038
        %v1040 = vand.u32 %v255, 4294901760
        %1041 = vmatmul.f32.gmra.mxu0 %v1040
        %v1042 = vpop.f32.mrf.mxu0
        %v1043 = vadd.f32 %v946, %v1042
        %v1044 = vand.u32 %v256, 4294901760
        %1045 = vmatmul.f32.gmra.mxu0 %v1044
        %v1046 = vpop.f32.mrf.mxu0
        %v1047 = vadd.f32 %v950, %v1046
        %v1048 = vand.u32 %v257, 4294901760
        %1049 = vmatmul.f32.gmra.mxu0 %v1048
        %v1050 = vpop.f32.mrf.mxu0
        %v1051 = vadd.f32 %v954, %v1050
        %v1052 = vand.u32 %v258, 4294901760
        %1053 = vmatmul.f32.gmra.mxu0 %v1052
        %v1054 = vpop.f32.mrf.mxu0
        %v1055 = vadd.f32 %v958, %v1054
        %v1056 = vand.u32 %v259, 4294901760
        %1057 = vmatmul.f32.gmra.mxu0 %v1056
        %v1058 = vpop.f32.mrf.mxu0
        %v1059 = vadd.f32 %v962, %v1058
        %v1060 = vand.u32 %v260, 4294901760
        %1061 = vmatmul.f32.gmra.mxu0 %v1060
        %v1062 = vpop.f32.mrf.mxu0
        %v1063 = vadd.f32 %v966, %v1062
        %v1064 = vand.u32 %v261, 4294901760
        %1065 = vmatmul.f32.gmra.mxu0 %v1064
        %v1066 = vpop.f32.mrf.mxu0
        %v1067 = vadd.f32 %v970, %v1066
        %v1068 = vand.u32 %v262, 4294901760
        %1069 = vmatmul.f32.gmra.mxu0 %v1068
        %v1070 = vpop.f32.mrf.mxu0
        %v1071 = vadd.f32 %v974, %v1070
        %v1072 = vand.u32 %v263, 4294901760
        %1073 = vmatmul.f32.gmra.mxu0 %v1072
        %v1074 = vpop.f32.mrf.mxu0
        %v1075 = vadd.f32 %v978, %v1074
        %v1076 = vand.u32 %v264, 4294901760
        %1077 = vmatmul.f32.gmra.mxu0 %v1076
        %v1078 = vpop.f32.mrf.mxu0
        %v1079 = vadd.f32 %v982, %v1078
        %v1080 = vand.u32 %v265, 4294901760
        %1081 = vmatmul.f32.gmra.mxu0 %v1080
        %v1082 = vpop.f32.mrf.mxu0
        %v1083 = vadd.f32 %v986, %v1082
        %v1084 = vand.u32 %v266, 4294901760
        %1085 = vmatmul.f32.gmra.mxu0 %v1084
        %v1086 = vpop.f32.mrf.mxu0
        %v1087 = vadd.f32 %v990, %v1086
        %1088 = vdwg.mxu0
        %v1089 = vmul.f32 %v1027, 0.015625
        %v1090 = vmul.f32 %v1031, 0.015625
        %v1091 = vmul.f32 %v1035, 0.015625
        %v1092 = vmul.f32 %v1039, 0.015625
        %v1093 = vmul.f32 %v1043, 0.015625
        %v1094 = vmul.f32 %v1047, 0.015625
        %v1095 = vmul.f32 %v1051, 0.015625
        %v1096 = vmul.f32 %v1055, 0.015625
        %v1097 = vmul.f32 %v1059, 0.015625
        %v1098 = vmul.f32 %v1063, 0.015625
        %v1099 = vmul.f32 %v1067, 0.015625
        %v1100 = vmul.f32 %v1071, 0.015625
        %v1101 = vmul.f32 %v1075, 0.015625
        %v1102 = vmul.f32 %v1079, 0.015625
        %v1103 = vmul.f32 %v1083, 0.015625
        %v1104 = vmul.f32 %v1087, 0.015625
        %v1105 = vsub.f32 %v251, %v1089
        %v1106 = vsub.f32 %v252, %v1090
        %v1107 = vsub.f32 %v253, %v1091
        %v1108 = vsub.f32 %v254, %v1092
        %v1109 = vsub.f32 %v255, %v1093
        %v1110 = vsub.f32 %v256, %v1094
        %v1111 = vsub.f32 %v257, %v1095
        %v1112 = vsub.f32 %v258, %v1096
        %v1113 = vsub.f32 %v259, %v1097
        %v1114 = vsub.f32 %v260, %v1098
        %v1115 = vsub.f32 %v261, %v1099
        %v1116 = vsub.f32 %v262, %v1100
        %v1117 = vsub.f32 %v263, %v1101
        %v1118 = vsub.f32 %v264, %v1102
        %v1119 = vsub.f32 %v265, %v1103
        %v1120 = vsub.f32 %v266, %v1104
        %v1121 = vmul.f32 %v1105, %v1105
        %v1122 = vmul.f32 %v1106, %v1106
        %v1123 = vmul.f32 %v1107, %v1107
        %v1124 = vmul.f32 %v1108, %v1108
        %v1125 = vmul.f32 %v1109, %v1109
        %v1126 = vmul.f32 %v1110, %v1110
        %v1127 = vmul.f32 %v1111, %v1111
        %v1128 = vmul.f32 %v1112, %v1112
        %v1129 = vmul.f32 %v1113, %v1113
        %v1130 = vmul.f32 %v1114, %v1114
        %v1131 = vmul.f32 %v1115, %v1115
        %v1132 = vmul.f32 %v1116, %v1116
        %v1133 = vmul.f32 %v1117, %v1117
        %v1134 = vmul.f32 %v1118, %v1118
        %v1135 = vmul.f32 %v1119, %v1119
        %v1136 = vmul.f32 %v1120, %v1120
        %v1137 = vand.u32 %v282, 4294901760
        %1138 = vmatpush.msra.mxu0 %v1137
        %v1139 = vand.u32 %v281, 4294901760
        %1140 = vmatpush.msra.mxu0 %v1139
        %v1141 = vand.u32 %v280, 4294901760
        %1142 = vmatpush.msra.mxu0 %v1141
        %v1143 = vand.u32 %v279, 4294901760
        %1144 = vmatpush.msra.mxu0 %v1143
        %v1145 = vand.u32 %v278, 4294901760
        %1146 = vmatpush.msra.mxu0 %v1145
        %v1147 = vand.u32 %v277, 4294901760
        %1148 = vmatpush.msra.mxu0 %v1147
        %v1149 = vand.u32 %v276, 4294901760
        %1150 = vmatpush.msra.mxu0 %v1149
        %v1151 = vand.u32 %v275, 4294901760
        %1152 = vmatpush.msra.mxu0 %v1151
        %v1153 = vand.u32 %v274, 4294901760
        %1154 = vmatpush.msra.mxu0 %v1153
        %v1155 = vand.u32 %v273, 4294901760
        %1156 = vmatpush.msra.mxu0 %v1155
        %v1157 = vand.u32 %v272, 4294901760
        %1158 = vmatpush.msra.mxu0 %v1157
        %v1159 = vand.u32 %v271, 4294901760
        %1160 = vmatpush.msra.mxu0 %v1159
        %v1161 = vand.u32 %v270, 4294901760
        %1162 = vmatpush.msra.mxu0 %v1161
        %v1163 = vand.u32 %v269, 4294901760
        %1164 = vmatpush.msra.mxu0 %v1163
        %v1165 = vand.u32 %v268, 4294901760
        %1166 = vmatpush.msra.mxu0 %v1165
        %v1167 = vand.u32 %v267, 4294901760
        %1168 = vmatpush.msra.mxu0 %v1167
        %v1169 = vand.u32 %v1121, 4294901760
        %v1170 = vsub.f32 %v1121, %v1169
        %v1171 = vand.u32 %v1170, 4294901760
        %v1172 = vsub.f32 %v1170, %v1171
        %v1173 = vand.u32 %v1172, 4294901760
        %1174 = vmatmul.f32.gmra.mxu0 %v1173
        %v1175 = vpop.f32.mrf.mxu0
        %v1176 = vadd.f32 0.0, %v1175
        %v1177 = vand.u32 %v1122, 4294901760
        %v1178 = vsub.f32 %v1122, %v1177
        %v1179 = vand.u32 %v1178, 4294901760
        %v1180 = vsub.f32 %v1178, %v1179
        %v1181 = vand.u32 %v1180, 4294901760
        %1182 = vmatmul.f32.gmra.mxu0 %v1181
        %v1183 = vpop.f32.mrf.mxu0
        %v1184 = vadd.f32 0.0, %v1183
        %v1185 = vand.u32 %v1123, 4294901760
        %v1186 = vsub.f32 %v1123, %v1185
        %v1187 = vand.u32 %v1186, 4294901760
        %v1188 = vsub.f32 %v1186, %v1187
        %v1189 = vand.u32 %v1188, 4294901760
        %1190 = vmatmul.f32.gmra.mxu0 %v1189
        %v1191 = vpop.f32.mrf.mxu0
        %v1192 = vadd.f32 0.0, %v1191
        %v1193 = vand.u32 %v1124, 4294901760
        %v1194 = vsub.f32 %v1124, %v1193
        %v1195 = vand.u32 %v1194, 4294901760
        %v1196 = vsub.f32 %v1194, %v1195
        %v1197 = vand.u32 %v1196, 4294901760
        %1198 = vmatmul.f32.gmra.mxu0 %v1197
        %v1199 = vpop.f32.mrf.mxu0
        %v1200 = vadd.f32 0.0, %v1199
        %v1201 = vand.u32 %v1125, 4294901760
        %v1202 = vsub.f32 %v1125, %v1201
        %v1203 = vand.u32 %v1202, 4294901760
        %v1204 = vsub.f32 %v1202, %v1203
        %v1205 = vand.u32 %v1204, 4294901760
        %1206 = vmatmul.f32.gmra.mxu0 %v1205
        %v1207 = vpop.f32.mrf.mxu0
        %v1208 = vadd.f32 0.0, %v1207
        %v1209 = vand.u32 %v1126, 4294901760
        %v1210 = vsub.f32 %v1126, %v1209
        %v1211 = vand.u32 %v1210, 4294901760
        %v1212 = vsub.f32 %v1210, %v1211
        %v1213 = vand.u32 %v1212, 4294901760
        %1214 = vmatmul.f32.gmra.mxu0 %v1213
        %v1215 = vpop.f32.mrf.mxu0
        %v1216 = vadd.f32 0.0, %v1215
        %v1217 = vand.u32 %v1127, 4294901760
        %v1218 = vsub.f32 %v1127, %v1217
        %v1219 = vand.u32 %v1218, 4294901760
        %v1220 = vsub.f32 %v1218, %v1219
        %v1221 = vand.u32 %v1220, 4294901760
        %1222 = vmatmul.f32.gmra.mxu0 %v1221
        %v1223 = vpop.f32.mrf.mxu0
        %v1224 = vadd.f32 0.0, %v1223
        %v1225 = vand.u32 %v1128, 4294901760
        %v1226 = vsub.f32 %v1128, %v1225
        %v1227 = vand.u32 %v1226, 4294901760
        %v1228 = vsub.f32 %v1226, %v1227
        %v1229 = vand.u32 %v1228, 4294901760
        %1230 = vmatmul.f32.gmra.mxu0 %v1229
        %v1231 = vpop.f32.mrf.mxu0
        %v1232 = vadd.f32 0.0, %v1231
        %v1233 = vand.u32 %v1129, 4294901760
        %v1234 = vsub.f32 %v1129, %v1233
        %v1235 = vand.u32 %v1234, 4294901760
        %v1236 = vsub.f32 %v1234, %v1235
        %v1237 = vand.u32 %v1236, 4294901760
        %1238 = vmatmul.f32.gmra.mxu0 %v1237
        %v1239 = vpop.f32.mrf.mxu0
        %v1240 = vadd.f32 0.0, %v1239
        %v1241 = vand.u32 %v1130, 4294901760
        %v1242 = vsub.f32 %v1130, %v1241
        %v1243 = vand.u32 %v1242, 4294901760
        %v1244 = vsub.f32 %v1242, %v1243
        %v1245 = vand.u32 %v1244, 4294901760
        %1246 = vmatmul.f32.gmra.mxu0 %v1245
        %v1247 = vpop.f32.mrf.mxu0
        %v1248 = vadd.f32 0.0, %v1247
        %v1249 = vand.u32 %v1131, 4294901760
        %v1250 = vsub.f32 %v1131, %v1249
        %v1251 = vand.u32 %v1250, 4294901760
        %v1252 = vsub.f32 %v1250, %v1251
        %v1253 = vand.u32 %v1252, 4294901760
        %1254 = vmatmul.f32.gmra.mxu0 %v1253
        %v1255 = vpop.f32.mrf.mxu0
        %v1256 = vadd.f32 0.0, %v1255
        %v1257 = vand.u32 %v1132, 4294901760
        %v1258 = vsub.f32 %v1132, %v1257
        %v1259 = vand.u32 %v1258, 4294901760
        %v1260 = vsub.f32 %v1258, %v1259
        %v1261 = vand.u32 %v1260, 4294901760
        %1262 = vmatmul.f32.gmra.mxu0 %v1261
        %v1263 = vpop.f32.mrf.mxu0
        %v1264 = vadd.f32 0.0, %v1263
        %v1265 = vand.u32 %v1133, 4294901760
        %v1266 = vsub.f32 %v1133, %v1265
        %v1267 = vand.u32 %v1266, 4294901760
        %v1268 = vsub.f32 %v1266, %v1267
        %v1269 = vand.u32 %v1268, 4294901760
        %1270 = vmatmul.f32.gmra.mxu0 %v1269
        %v1271 = vpop.f32.mrf.mxu0
        %v1272 = vadd.f32 0.0, %v1271
        %v1273 = vand.u32 %v1134, 4294901760
        %v1274 = vsub.f32 %v1134, %v1273
        %v1275 = vand.u32 %v1274, 4294901760
        %v1276 = vsub.f32 %v1274, %v1275
        %v1277 = vand.u32 %v1276, 4294901760
        %1278 = vmatmul.f32.gmra.mxu0 %v1277
        %v1279 = vpop.f32.mrf.mxu0
        %v1280 = vadd.f32 0.0, %v1279
        %v1281 = vand.u32 %v1135, 4294901760
        %v1282 = vsub.f32 %v1135, %v1281
        %v1283 = vand.u32 %v1282, 4294901760
        %v1284 = vsub.f32 %v1282, %v1283
        %v1285 = vand.u32 %v1284, 4294901760
        %1286 = vmatmul.f32.gmra.mxu0 %v1285
        %v1287 = vpop.f32.mrf.mxu0
        %v1288 = vadd.f32 0.0, %v1287
        %v1289 = vand.u32 %v1136, 4294901760
        %v1290 = vsub.f32 %v1136, %v1289
        %v1291 = vand.u32 %v1290, 4294901760
        %v1292 = vsub.f32 %v1290, %v1291
        %v1293 = vand.u32 %v1292, 4294901760
        %1294 = vmatmul.f32.gmra.mxu0 %v1293
        %v1295 = vpop.f32.mrf.mxu0
        %v1296 = vadd.f32 0.0, %v1295
        %1297 = vdwg.mxu0
        %v1298 = vand.u32 %v282, 4294901760
        %v1299 = vsub.f32 %v282, %v1298
        %v1300 = vand.u32 %v1299, 4294901760
        %v1301 = vsub.f32 %v1299, %v1300
        %v1302 = vand.u32 %v1301, 4294901760
        %1303 = vmatpush.msra.mxu0 %v1302
        %v1304 = vand.u32 %v281, 4294901760
        %v1305 = vsub.f32 %v281, %v1304
        %v1306 = vand.u32 %v1305, 4294901760
        %v1307 = vsub.f32 %v1305, %v1306
        %v1308 = vand.u32 %v1307, 4294901760
        %1309 = vmatpush.msra.mxu0 %v1308
        %v1310 = vand.u32 %v280, 4294901760
        %v1311 = vsub.f32 %v280, %v1310
        %v1312 = vand.u32 %v1311, 4294901760
        %v1313 = vsub.f32 %v1311, %v1312
        %v1314 = vand.u32 %v1313, 4294901760
        %1315 = vmatpush.msra.mxu0 %v1314
        %v1316 = vand.u32 %v279, 4294901760
        %v1317 = vsub.f32 %v279, %v1316
        %v1318 = vand.u32 %v1317, 4294901760
        %v1319 = vsub.f32 %v1317, %v1318
        %v1320 = vand.u32 %v1319, 4294901760
        %1321 = vmatpush.msra.mxu0 %v1320
        %v1322 = vand.u32 %v278, 4294901760
        %v1323 = vsub.f32 %v278, %v1322
        %v1324 = vand.u32 %v1323, 4294901760
        %v1325 = vsub.f32 %v1323, %v1324
        %v1326 = vand.u32 %v1325, 4294901760
        %1327 = vmatpush.msra.mxu0 %v1326
        %v1328 = vand.u32 %v277, 4294901760
        %v1329 = vsub.f32 %v277, %v1328
        %v1330 = vand.u32 %v1329, 4294901760
        %v1331 = vsub.f32 %v1329, %v1330
        %v1332 = vand.u32 %v1331, 4294901760
        %1333 = vmatpush.msra.mxu0 %v1332
        %v1334 = vand.u32 %v276, 4294901760
        %v1335 = vsub.f32 %v276, %v1334
        %v1336 = vand.u32 %v1335, 4294901760
        %v1337 = vsub.f32 %v1335, %v1336
        %v1338 = vand.u32 %v1337, 4294901760
        %1339 = vmatpush.msra.mxu0 %v1338
        %v1340 = vand.u32 %v275, 4294901760
        %v1341 = vsub.f32 %v275, %v1340
        %v1342 = vand.u32 %v1341, 4294901760
        %v1343 = vsub.f32 %v1341, %v1342
        %v1344 = vand.u32 %v1343, 4294901760
        %1345 = vmatpush.msra.mxu0 %v1344
        %v1346 = vand.u32 %v274, 4294901760
        %v1347 = vsub.f32 %v274, %v1346
        %v1348 = vand.u32 %v1347, 4294901760
        %v1349 = vsub.f32 %v1347, %v1348
        %v1350 = vand.u32 %v1349, 4294901760
        %1351 = vmatpush.msra.mxu0 %v1350
        %v1352 = vand.u32 %v273, 4294901760
        %v1353 = vsub.f32 %v273, %v1352
        %v1354 = vand.u32 %v1353, 4294901760
        %v1355 = vsub.f32 %v1353, %v1354
        %v1356 = vand.u32 %v1355, 4294901760
        %1357 = vmatpush.msra.mxu0 %v1356
        %v1358 = vand.u32 %v272, 4294901760
        %v1359 = vsub.f32 %v272, %v1358
        %v1360 = vand.u32 %v1359, 4294901760
        %v1361 = vsub.f32 %v1359, %v1360
        %v1362 = vand.u32 %v1361, 4294901760
        %1363 = vmatpush.msra.mxu0 %v1362
        %v1364 = vand.u32 %v271, 4294901760
        %v1365 = vsub.f32 %v271, %v1364
        %v1366 = vand.u32 %v1365, 4294901760
        %v1367 = vsub.f32 %v1365, %v1366
        %v1368 = vand.u32 %v1367, 4294901760
        %1369 = vmatpush.msra.mxu0 %v1368
        %v1370 = vand.u32 %v270, 4294901760
        %v1371 = vsub.f32 %v270, %v1370
        %v1372 = vand.u32 %v1371, 4294901760
        %v1373 = vsub.f32 %v1371, %v1372
        %v1374 = vand.u32 %v1373, 4294901760
        %1375 = vmatpush.msra.mxu0 %v1374
        %v1376 = vand.u32 %v269, 4294901760
        %v1377 = vsub.f32 %v269, %v1376
        %v1378 = vand.u32 %v1377, 4294901760
        %v1379 = vsub.f32 %v1377, %v1378
        %v1380 = vand.u32 %v1379, 4294901760
        %1381 = vmatpush.msra.mxu0 %v1380
        %v1382 = vand.u32 %v268, 4294901760
        %v1383 = vsub.f32 %v268, %v1382
        %v1384 = vand.u32 %v1383, 4294901760
        %v1385 = vsub.f32 %v1383, %v1384
        %v1386 = vand.u32 %v1385, 4294901760
        %1387 = vmatpush.msra.mxu0 %v1386
        %v1388 = vand.u32 %v267, 4294901760
        %v1389 = vsub.f32 %v267, %v1388
        %v1390 = vand.u32 %v1389, 4294901760
        %v1391 = vsub.f32 %v1389, %v1390
        %v1392 = vand.u32 %v1391, 4294901760
        %1393 = vmatpush.msra.mxu0 %v1392
        %v1394 = vand.u32 %v1121, 4294901760
        %1395 = vmatmul.f32.gmra.mxu0 %v1394
        %v1396 = vpop.f32.mrf.mxu0
        %v1397 = vadd.f32 %v1176, %v1396
        %v1398 = vand.u32 %v1122, 4294901760
        %1399 = vmatmul.f32.gmra.mxu0 %v1398
        %v1400 = vpop.f32.mrf.mxu0
        %v1401 = vadd.f32 %v1184, %v1400
        %v1402 = vand.u32 %v1123, 4294901760
        %1403 = vmatmul.f32.gmra.mxu0 %v1402
        %v1404 = vpop.f32.mrf.mxu0
        %v1405 = vadd.f32 %v1192, %v1404
        %v1406 = vand.u32 %v1124, 4294901760
        %1407 = vmatmul.f32.gmra.mxu0 %v1406
        %v1408 = vpop.f32.mrf.mxu0
        %v1409 = vadd.f32 %v1200, %v1408
        %v1410 = vand.u32 %v1125, 4294901760
        %1411 = vmatmul.f32.gmra.mxu0 %v1410
        %v1412 = vpop.f32.mrf.mxu0
        %v1413 = vadd.f32 %v1208, %v1412
        %v1414 = vand.u32 %v1126, 4294901760
        %1415 = vmatmul.f32.gmra.mxu0 %v1414
        %v1416 = vpop.f32.mrf.mxu0
        %v1417 = vadd.f32 %v1216, %v1416
        %v1418 = vand.u32 %v1127, 4294901760
        %1419 = vmatmul.f32.gmra.mxu0 %v1418
        %v1420 = vpop.f32.mrf.mxu0
        %v1421 = vadd.f32 %v1224, %v1420
        %v1422 = vand.u32 %v1128, 4294901760
        %1423 = vmatmul.f32.gmra.mxu0 %v1422
        %v1424 = vpop.f32.mrf.mxu0
        %v1425 = vadd.f32 %v1232, %v1424
        %v1426 = vand.u32 %v1129, 4294901760
        %1427 = vmatmul.f32.gmra.mxu0 %v1426
        %v1428 = vpop.f32.mrf.mxu0
        %v1429 = vadd.f32 %v1240, %v1428
        %v1430 = vand.u32 %v1130, 4294901760
        %1431 = vmatmul.f32.gmra.mxu0 %v1430
        %v1432 = vpop.f32.mrf.mxu0
        %v1433 = vadd.f32 %v1248, %v1432
        %v1434 = vand.u32 %v1131, 4294901760
        %1435 = vmatmul.f32.gmra.mxu0 %v1434
        %v1436 = vpop.f32.mrf.mxu0
        %v1437 = vadd.f32 %v1256, %v1436
        %v1438 = vand.u32 %v1132, 4294901760
        %1439 = vmatmul.f32.gmra.mxu0 %v1438
        %v1440 = vpop.f32.mrf.mxu0
        %v1441 = vadd.f32 %v1264, %v1440
        %v1442 = vand.u32 %v1133, 4294901760
        %1443 = vmatmul.f32.gmra.mxu0 %v1442
        %v1444 = vpop.f32.mrf.mxu0
        %v1445 = vadd.f32 %v1272, %v1444
        %v1446 = vand.u32 %v1134, 4294901760
        %1447 = vmatmul.f32.gmra.mxu0 %v1446
        %v1448 = vpop.f32.mrf.mxu0
        %v1449 = vadd.f32 %v1280, %v1448
        %v1450 = vand.u32 %v1135, 4294901760
        %1451 = vmatmul.f32.gmra.mxu0 %v1450
        %v1452 = vpop.f32.mrf.mxu0
        %v1453 = vadd.f32 %v1288, %v1452
        %v1454 = vand.u32 %v1136, 4294901760
        %1455 = vmatmul.f32.gmra.mxu0 %v1454
        %v1456 = vpop.f32.mrf.mxu0
        %v1457 = vadd.f32 %v1296, %v1456
        %1458 = vdwg.mxu0
        %v1459 = vand.u32 %v282, 4294901760
        %v1460 = vsub.f32 %v282, %v1459
        %1461 = vmatpush.msra.mxu0 %v1460
        %v1462 = vand.u32 %v281, 4294901760
        %v1463 = vsub.f32 %v281, %v1462
        %1464 = vmatpush.msra.mxu0 %v1463
        %v1465 = vand.u32 %v280, 4294901760
        %v1466 = vsub.f32 %v280, %v1465
        %1467 = vmatpush.msra.mxu0 %v1466
        %v1468 = vand.u32 %v279, 4294901760
        %v1469 = vsub.f32 %v279, %v1468
        %1470 = vmatpush.msra.mxu0 %v1469
        %v1471 = vand.u32 %v278, 4294901760
        %v1472 = vsub.f32 %v278, %v1471
        %1473 = vmatpush.msra.mxu0 %v1472
        %v1474 = vand.u32 %v277, 4294901760
        %v1475 = vsub.f32 %v277, %v1474
        %1476 = vmatpush.msra.mxu0 %v1475
        %v1477 = vand.u32 %v276, 4294901760
        %v1478 = vsub.f32 %v276, %v1477
        %1479 = vmatpush.msra.mxu0 %v1478
        %v1480 = vand.u32 %v275, 4294901760
        %v1481 = vsub.f32 %v275, %v1480
        %1482 = vmatpush.msra.mxu0 %v1481
        %v1483 = vand.u32 %v274, 4294901760
        %v1484 = vsub.f32 %v274, %v1483
        %1485 = vmatpush.msra.mxu0 %v1484
        %v1486 = vand.u32 %v273, 4294901760
        %v1487 = vsub.f32 %v273, %v1486
        %1488 = vmatpush.msra.mxu0 %v1487
        %v1489 = vand.u32 %v272, 4294901760
        %v1490 = vsub.f32 %v272, %v1489
        %1491 = vmatpush.msra.mxu0 %v1490
        %v1492 = vand.u32 %v271, 4294901760
        %v1493 = vsub.f32 %v271, %v1492
        %1494 = vmatpush.msra.mxu0 %v1493
        %v1495 = vand.u32 %v270, 4294901760
        %v1496 = vsub.f32 %v270, %v1495
        %1497 = vmatpush.msra.mxu0 %v1496
        %v1498 = vand.u32 %v269, 4294901760
        %v1499 = vsub.f32 %v269, %v1498
        %1500 = vmatpush.msra.mxu0 %v1499
        %v1501 = vand.u32 %v268, 4294901760
        %v1502 = vsub.f32 %v268, %v1501
        %1503 = vmatpush.msra.mxu0 %v1502
        %v1504 = vand.u32 %v267, 4294901760
        %v1505 = vsub.f32 %v267, %v1504
        %1506 = vmatpush.msra.mxu0 %v1505
        %v1507 = vand.u32 %v1121, 4294901760
        %v1508 = vsub.f32 %v1121, %v1507
        %1509 = vmatmul.f32.gmra.mxu0 %v1508
        %v1510 = vpop.f32.mrf.mxu0
        %v1511 = vadd.f32 %v1397, %v1510
        %v1512 = vand.u32 %v1122, 4294901760
        %v1513 = vsub.f32 %v1122, %v1512
        %1514 = vmatmul.f32.gmra.mxu0 %v1513
        %v1515 = vpop.f32.mrf.mxu0
        %v1516 = vadd.f32 %v1401, %v1515
        %v1517 = vand.u32 %v1123, 4294901760
        %v1518 = vsub.f32 %v1123, %v1517
        %1519 = vmatmul.f32.gmra.mxu0 %v1518
        %v1520 = vpop.f32.mrf.mxu0
        %v1521 = vadd.f32 %v1405, %v1520
        %v1522 = vand.u32 %v1124, 4294901760
        %v1523 = vsub.f32 %v1124, %v1522
        %1524 = vmatmul.f32.gmra.mxu0 %v1523
        %v1525 = vpop.f32.mrf.mxu0
        %v1526 = vadd.f32 %v1409, %v1525
        %v1527 = vand.u32 %v1125, 4294901760
        %v1528 = vsub.f32 %v1125, %v1527
        %1529 = vmatmul.f32.gmra.mxu0 %v1528
        %v1530 = vpop.f32.mrf.mxu0
        %v1531 = vadd.f32 %v1413, %v1530
        %v1532 = vand.u32 %v1126, 4294901760
        %v1533 = vsub.f32 %v1126, %v1532
        %1534 = vmatmul.f32.gmra.mxu0 %v1533
        %v1535 = vpop.f32.mrf.mxu0
        %v1536 = vadd.f32 %v1417, %v1535
        %v1537 = vand.u32 %v1127, 4294901760
        %v1538 = vsub.f32 %v1127, %v1537
        %1539 = vmatmul.f32.gmra.mxu0 %v1538
        %v1540 = vpop.f32.mrf.mxu0
        %v1541 = vadd.f32 %v1421, %v1540
        %v1542 = vand.u32 %v1128, 4294901760
        %v1543 = vsub.f32 %v1128, %v1542
        %1544 = vmatmul.f32.gmra.mxu0 %v1543
        %v1545 = vpop.f32.mrf.mxu0
        %v1546 = vadd.f32 %v1425, %v1545
        %v1547 = vand.u32 %v1129, 4294901760
        %v1548 = vsub.f32 %v1129, %v1547
        %1549 = vmatmul.f32.gmra.mxu0 %v1548
        %v1550 = vpop.f32.mrf.mxu0
        %v1551 = vadd.f32 %v1429, %v1550
        %v1552 = vand.u32 %v1130, 4294901760
        %v1553 = vsub.f32 %v1130, %v1552
        %1554 = vmatmul.f32.gmra.mxu0 %v1553
        %v1555 = vpop.f32.mrf.mxu0
        %v1556 = vadd.f32 %v1433, %v1555
        %v1557 = vand.u32 %v1131, 4294901760
        %v1558 = vsub.f32 %v1131, %v1557
        %1559 = vmatmul.f32.gmra.mxu0 %v1558
        %v1560 = vpop.f32.mrf.mxu0
        %v1561 = vadd.f32 %v1437, %v1560
        %v1562 = vand.u32 %v1132, 4294901760
        %v1563 = vsub.f32 %v1132, %v1562
        %1564 = vmatmul.f32.gmra.mxu0 %v1563
        %v1565 = vpop.f32.mrf.mxu0
        %v1566 = vadd.f32 %v1441, %v1565
        %v1567 = vand.u32 %v1133, 4294901760
        %v1568 = vsub.f32 %v1133, %v1567
        %1569 = vmatmul.f32.gmra.mxu0 %v1568
        %v1570 = vpop.f32.mrf.mxu0
        %v1571 = vadd.f32 %v1445, %v1570
        %v1572 = vand.u32 %v1134, 4294901760
        %v1573 = vsub.f32 %v1134, %v1572
        %1574 = vmatmul.f32.gmra.mxu0 %v1573
        %v1575 = vpop.f32.mrf.mxu0
        %v1576 = vadd.f32 %v1449, %v1575
        %v1577 = vand.u32 %v1135, 4294901760
        %v1578 = vsub.f32 %v1135, %v1577
        %1579 = vmatmul.f32.gmra.mxu0 %v1578
        %v1580 = vpop.f32.mrf.mxu0
        %v1581 = vadd.f32 %v1453, %v1580
        %v1582 = vand.u32 %v1136, 4294901760
        %v1583 = vsub.f32 %v1136, %v1582
        %1584 = vmatmul.f32.gmra.mxu0 %v1583
        %v1585 = vpop.f32.mrf.mxu0
        %v1586 = vadd.f32 %v1457, %v1585
        %1587 = vdwg.mxu0
        %v1588 = vand.u32 %v282, 4294901760
        %1589 = vmatpush.msra.mxu0 %v1588
        %v1590 = vand.u32 %v281, 4294901760
        %1591 = vmatpush.msra.mxu0 %v1590
        %v1592 = vand.u32 %v280, 4294901760
        %1593 = vmatpush.msra.mxu0 %v1592
        %v1594 = vand.u32 %v279, 4294901760
        %1595 = vmatpush.msra.mxu0 %v1594
        %v1596 = vand.u32 %v278, 4294901760
        %1597 = vmatpush.msra.mxu0 %v1596
        %v1598 = vand.u32 %v277, 4294901760
        %1599 = vmatpush.msra.mxu0 %v1598
        %v1600 = vand.u32 %v276, 4294901760
        %1601 = vmatpush.msra.mxu0 %v1600
        %v1602 = vand.u32 %v275, 4294901760
        %1603 = vmatpush.msra.mxu0 %v1602
        %v1604 = vand.u32 %v274, 4294901760
        %1605 = vmatpush.msra.mxu0 %v1604
        %v1606 = vand.u32 %v273, 4294901760
        %1607 = vmatpush.msra.mxu0 %v1606
        %v1608 = vand.u32 %v272, 4294901760
        %1609 = vmatpush.msra.mxu0 %v1608
        %v1610 = vand.u32 %v271, 4294901760
        %1611 = vmatpush.msra.mxu0 %v1610
        %v1612 = vand.u32 %v270, 4294901760
        %1613 = vmatpush.msra.mxu0 %v1612
        %v1614 = vand.u32 %v269, 4294901760
        %1615 = vmatpush.msra.mxu0 %v1614
        %v1616 = vand.u32 %v268, 4294901760
        %1617 = vmatpush.msra.mxu0 %v1616
        %v1618 = vand.u32 %v267, 4294901760
        %1619 = vmatpush.msra.mxu0 %v1618
        %v1620 = vand.u32 %v1121, 4294901760
        %v1621 = vsub.f32 %v1121, %v1620
        %v1622 = vand.u32 %v1621, 4294901760
        %1623 = vmatmul.f32.gmra.mxu0 %v1622
        %v1624 = vpop.f32.mrf.mxu0
        %v1625 = vadd.f32 %v1511, %v1624
        %v1626 = vand.u32 %v1122, 4294901760
        %v1627 = vsub.f32 %v1122, %v1626
        %v1628 = vand.u32 %v1627, 4294901760
        %1629 = vmatmul.f32.gmra.mxu0 %v1628
        %v1630 = vpop.f32.mrf.mxu0
        %v1631 = vadd.f32 %v1516, %v1630
        %v1632 = vand.u32 %v1123, 4294901760
        %v1633 = vsub.f32 %v1123, %v1632
        %v1634 = vand.u32 %v1633, 4294901760
        %1635 = vmatmul.f32.gmra.mxu0 %v1634
        %v1636 = vpop.f32.mrf.mxu0
        %v1637 = vadd.f32 %v1521, %v1636
        %v1638 = vand.u32 %v1124, 4294901760
        %v1639 = vsub.f32 %v1124, %v1638
        %v1640 = vand.u32 %v1639, 4294901760
        %1641 = vmatmul.f32.gmra.mxu0 %v1640
        %v1642 = vpop.f32.mrf.mxu0
        %v1643 = vadd.f32 %v1526, %v1642
        %v1644 = vand.u32 %v1125, 4294901760
        %v1645 = vsub.f32 %v1125, %v1644
        %v1646 = vand.u32 %v1645, 4294901760
        %1647 = vmatmul.f32.gmra.mxu0 %v1646
        %v1648 = vpop.f32.mrf.mxu0
        %v1649 = vadd.f32 %v1531, %v1648
        %v1650 = vand.u32 %v1126, 4294901760
        %v1651 = vsub.f32 %v1126, %v1650
        %v1652 = vand.u32 %v1651, 4294901760
        %1653 = vmatmul.f32.gmra.mxu0 %v1652
        %v1654 = vpop.f32.mrf.mxu0
        %v1655 = vadd.f32 %v1536, %v1654
        %v1656 = vand.u32 %v1127, 4294901760
        %v1657 = vsub.f32 %v1127, %v1656
        %v1658 = vand.u32 %v1657, 4294901760
        %1659 = vmatmul.f32.gmra.mxu0 %v1658
        %v1660 = vpop.f32.mrf.mxu0
        %v1661 = vadd.f32 %v1541, %v1660
        %v1662 = vand.u32 %v1128, 4294901760
        %v1663 = vsub.f32 %v1128, %v1662
        %v1664 = vand.u32 %v1663, 4294901760
        %1665 = vmatmul.f32.gmra.mxu0 %v1664
        %v1666 = vpop.f32.mrf.mxu0
        %v1667 = vadd.f32 %v1546, %v1666
        %v1668 = vand.u32 %v1129, 4294901760
        %v1669 = vsub.f32 %v1129, %v1668
        %v1670 = vand.u32 %v1669, 4294901760
        %1671 = vmatmul.f32.gmra.mxu0 %v1670
        %v1672 = vpop.f32.mrf.mxu0
        %v1673 = vadd.f32 %v1551, %v1672
        %v1674 = vand.u32 %v1130, 4294901760
        %v1675 = vsub.f32 %v1130, %v1674
        %v1676 = vand.u32 %v1675, 4294901760
        %1677 = vmatmul.f32.gmra.mxu0 %v1676
        %v1678 = vpop.f32.mrf.mxu0
        %v1679 = vadd.f32 %v1556, %v1678
        %v1680 = vand.u32 %v1131, 4294901760
        %v1681 = vsub.f32 %v1131, %v1680
        %v1682 = vand.u32 %v1681, 4294901760
        %1683 = vmatmul.f32.gmra.mxu0 %v1682
        %v1684 = vpop.f32.mrf.mxu0
        %v1685 = vadd.f32 %v1561, %v1684
        %v1686 = vand.u32 %v1132, 4294901760
        %v1687 = vsub.f32 %v1132, %v1686
        %v1688 = vand.u32 %v1687, 4294901760
        %1689 = vmatmul.f32.gmra.mxu0 %v1688
        %v1690 = vpop.f32.mrf.mxu0
        %v1691 = vadd.f32 %v1566, %v1690
        %v1692 = vand.u32 %v1133, 4294901760
        %v1693 = vsub.f32 %v1133, %v1692
        %v1694 = vand.u32 %v1693, 4294901760
        %1695 = vmatmul.f32.gmra.mxu0 %v1694
        %v1696 = vpop.f32.mrf.mxu0
        %v1697 = vadd.f32 %v1571, %v1696
        %v1698 = vand.u32 %v1134, 4294901760
        %v1699 = vsub.f32 %v1134, %v1698
        %v1700 = vand.u32 %v1699, 4294901760
        %1701 = vmatmul.f32.gmra.mxu0 %v1700
        %v1702 = vpop.f32.mrf.mxu0
        %v1703 = vadd.f32 %v1576, %v1702
        %v1704 = vand.u32 %v1135, 4294901760
        %v1705 = vsub.f32 %v1135, %v1704
        %v1706 = vand.u32 %v1705, 4294901760
        %1707 = vmatmul.f32.gmra.mxu0 %v1706
        %v1708 = vpop.f32.mrf.mxu0
        %v1709 = vadd.f32 %v1581, %v1708
        %v1710 = vand.u32 %v1136, 4294901760
        %v1711 = vsub.f32 %v1136, %v1710
        %v1712 = vand.u32 %v1711, 4294901760
        %1713 = vmatmul.f32.gmra.mxu0 %v1712
        %v1714 = vpop.f32.mrf.mxu0
        %v1715 = vadd.f32 %v1586, %v1714
        %1716 = vdwg.mxu0
        %v1717 = vand.u32 %v282, 4294901760
        %v1718 = vsub.f32 %v282, %v1717
        %v1719 = vand.u32 %v1718, 4294901760
        %1720 = vmatpush.msra.mxu0 %v1719
        %v1721 = vand.u32 %v281, 4294901760
        %v1722 = vsub.f32 %v281, %v1721
        %v1723 = vand.u32 %v1722, 4294901760
        %1724 = vmatpush.msra.mxu0 %v1723
        %v1725 = vand.u32 %v280, 4294901760
        %v1726 = vsub.f32 %v280, %v1725
        %v1727 = vand.u32 %v1726, 4294901760
        %1728 = vmatpush.msra.mxu0 %v1727
        %v1729 = vand.u32 %v279, 4294901760
        %v1730 = vsub.f32 %v279, %v1729
        %v1731 = vand.u32 %v1730, 4294901760
        %1732 = vmatpush.msra.mxu0 %v1731
        %v1733 = vand.u32 %v278, 4294901760
        %v1734 = vsub.f32 %v278, %v1733
        %v1735 = vand.u32 %v1734, 4294901760
        %1736 = vmatpush.msra.mxu0 %v1735
        %v1737 = vand.u32 %v277, 4294901760
        %v1738 = vsub.f32 %v277, %v1737
        %v1739 = vand.u32 %v1738, 4294901760
        %1740 = vmatpush.msra.mxu0 %v1739
        %v1741 = vand.u32 %v276, 4294901760
        %v1742 = vsub.f32 %v276, %v1741
        %v1743 = vand.u32 %v1742, 4294901760
        %1744 = vmatpush.msra.mxu0 %v1743
        %v1745 = vand.u32 %v275, 4294901760
        %v1746 = vsub.f32 %v275, %v1745
        %v1747 = vand.u32 %v1746, 4294901760
        %1748 = vmatpush.msra.mxu0 %v1747
        %v1749 = vand.u32 %v274, 4294901760
        %v1750 = vsub.f32 %v274, %v1749
        %v1751 = vand.u32 %v1750, 4294901760
        %1752 = vmatpush.msra.mxu0 %v1751
        %v1753 = vand.u32 %v273, 4294901760
        %v1754 = vsub.f32 %v273, %v1753
        %v1755 = vand.u32 %v1754, 4294901760
        %1756 = vmatpush.msra.mxu0 %v1755
        %v1757 = vand.u32 %v272, 4294901760
        %v1758 = vsub.f32 %v272, %v1757
        %v1759 = vand.u32 %v1758, 4294901760
        %1760 = vmatpush.msra.mxu0 %v1759
        %v1761 = vand.u32 %v271, 4294901760
        %v1762 = vsub.f32 %v271, %v1761
        %v1763 = vand.u32 %v1762, 4294901760
        %1764 = vmatpush.msra.mxu0 %v1763
        %v1765 = vand.u32 %v270, 4294901760
        %v1766 = vsub.f32 %v270, %v1765
        %v1767 = vand.u32 %v1766, 4294901760
        %1768 = vmatpush.msra.mxu0 %v1767
        %v1769 = vand.u32 %v269, 4294901760
        %v1770 = vsub.f32 %v269, %v1769
        %v1771 = vand.u32 %v1770, 4294901760
        %1772 = vmatpush.msra.mxu0 %v1771
        %v1773 = vand.u32 %v268, 4294901760
        %v1774 = vsub.f32 %v268, %v1773
        %v1775 = vand.u32 %v1774, 4294901760
        %1776 = vmatpush.msra.mxu0 %v1775
        %v1777 = vand.u32 %v267, 4294901760
        %v1778 = vsub.f32 %v267, %v1777
        %v1779 = vand.u32 %v1778, 4294901760
        %1780 = vmatpush.msra.mxu0 %v1779
        %v1781 = vand.u32 %v1121, 4294901760
        %1782 = vmatmul.f32.gmra.mxu0 %v1781
        %v1783 = vpop.f32.mrf.mxu0
        %v1784 = vadd.f32 %v1625, %v1783
        %v1785 = vand.u32 %v1122, 4294901760
        %1786 = vmatmul.f32.gmra.mxu0 %v1785
        %v1787 = vpop.f32.mrf.mxu0
        %v1788 = vadd.f32 %v1631, %v1787
        %v1789 = vand.u32 %v1123, 4294901760
        %1790 = vmatmul.f32.gmra.mxu0 %v1789
        %v1791 = vpop.f32.mrf.mxu0
        %v1792 = vadd.f32 %v1637, %v1791
        %v1793 = vand.u32 %v1124, 4294901760
        %1794 = vmatmul.f32.gmra.mxu0 %v1793
        %v1795 = vpop.f32.mrf.mxu0
        %v1796 = vadd.f32 %v1643, %v1795
        %v1797 = vand.u32 %v1125, 4294901760
        %1798 = vmatmul.f32.gmra.mxu0 %v1797
        %v1799 = vpop.f32.mrf.mxu0
        %v1800 = vadd.f32 %v1649, %v1799
        %v1801 = vand.u32 %v1126, 4294901760
        %1802 = vmatmul.f32.gmra.mxu0 %v1801
        %v1803 = vpop.f32.mrf.mxu0
        %v1804 = vadd.f32 %v1655, %v1803
        %v1805 = vand.u32 %v1127, 4294901760
        %1806 = vmatmul.f32.gmra.mxu0 %v1805
        %v1807 = vpop.f32.mrf.mxu0
        %v1808 = vadd.f32 %v1661, %v1807
        %v1809 = vand.u32 %v1128, 4294901760
        %1810 = vmatmul.f32.gmra.mxu0 %v1809
        %v1811 = vpop.f32.mrf.mxu0
        %v1812 = vadd.f32 %v1667, %v1811
        %v1813 = vand.u32 %v1129, 4294901760
        %1814 = vmatmul.f32.gmra.mxu0 %v1813
        %v1815 = vpop.f32.mrf.mxu0
        %v1816 = vadd.f32 %v1673, %v1815
        %v1817 = vand.u32 %v1130, 4294901760
        %1818 = vmatmul.f32.gmra.mxu0 %v1817
        %v1819 = vpop.f32.mrf.mxu0
        %v1820 = vadd.f32 %v1679, %v1819
        %v1821 = vand.u32 %v1131, 4294901760
        %1822 = vmatmul.f32.gmra.mxu0 %v1821
        %v1823 = vpop.f32.mrf.mxu0
        %v1824 = vadd.f32 %v1685, %v1823
        %v1825 = vand.u32 %v1132, 4294901760
        %1826 = vmatmul.f32.gmra.mxu0 %v1825
        %v1827 = vpop.f32.mrf.mxu0
        %v1828 = vadd.f32 %v1691, %v1827
        %v1829 = vand.u32 %v1133, 4294901760
        %1830 = vmatmul.f32.gmra.mxu0 %v1829
        %v1831 = vpop.f32.mrf.mxu0
        %v1832 = vadd.f32 %v1697, %v1831
        %v1833 = vand.u32 %v1134, 4294901760
        %1834 = vmatmul.f32.gmra.mxu0 %v1833
        %v1835 = vpop.f32.mrf.mxu0
        %v1836 = vadd.f32 %v1703, %v1835
        %v1837 = vand.u32 %v1135, 4294901760
        %1838 = vmatmul.f32.gmra.mxu0 %v1837
        %v1839 = vpop.f32.mrf.mxu0
        %v1840 = vadd.f32 %v1709, %v1839
        %v1841 = vand.u32 %v1136, 4294901760
        %1842 = vmatmul.f32.gmra.mxu0 %v1841
        %v1843 = vpop.f32.mrf.mxu0
        %v1844 = vadd.f32 %v1715, %v1843
        %1845 = vdwg.mxu0
        %v1846 = vand.u32 %v282, 4294901760
        %1847 = vmatpush.msra.mxu0 %v1846
        %v1848 = vand.u32 %v281, 4294901760
        %1849 = vmatpush.msra.mxu0 %v1848
        %v1850 = vand.u32 %v280, 4294901760
        %1851 = vmatpush.msra.mxu0 %v1850
        %v1852 = vand.u32 %v279, 4294901760
        %1853 = vmatpush.msra.mxu0 %v1852
        %v1854 = vand.u32 %v278, 4294901760
        %1855 = vmatpush.msra.mxu0 %v1854
        %v1856 = vand.u32 %v277, 4294901760
        %1857 = vmatpush.msra.mxu0 %v1856
        %v1858 = vand.u32 %v276, 4294901760
        %1859 = vmatpush.msra.mxu0 %v1858
        %v1860 = vand.u32 %v275, 4294901760
        %1861 = vmatpush.msra.mxu0 %v1860
        %v1862 = vand.u32 %v274, 4294901760
        %1863 = vmatpush.msra.mxu0 %v1862
        %v1864 = vand.u32 %v273, 4294901760
        %1865 = vmatpush.msra.mxu0 %v1864
        %v1866 = vand.u32 %v272, 4294901760
        %1867 = vmatpush.msra.mxu0 %v1866
        %v1868 = vand.u32 %v271, 4294901760
        %1869 = vmatpush.msra.mxu0 %v1868
        %v1870 = vand.u32 %v270, 4294901760
        %1871 = vmatpush.msra.mxu0 %v1870
        %v1872 = vand.u32 %v269, 4294901760
        %1873 = vmatpush.msra.mxu0 %v1872
        %v1874 = vand.u32 %v268, 4294901760
        %1875 = vmatpush.msra.mxu0 %v1874
        %v1876 = vand.u32 %v267, 4294901760
        %1877 = vmatpush.msra.mxu0 %v1876
        %v1878 = vand.u32 %v1121, 4294901760
        %1879 = vmatmul.f32.gmra.mxu0 %v1878
        %v1880 = vpop.f32.mrf.mxu0
        %v1881 = vadd.f32 %v1784, %v1880
        %v1882 = vand.u32 %v1122, 4294901760
        %1883 = vmatmul.f32.gmra.mxu0 %v1882
        %v1884 = vpop.f32.mrf.mxu0
        %v1885 = vadd.f32 %v1788, %v1884
        %v1886 = vand.u32 %v1123, 4294901760
        %1887 = vmatmul.f32.gmra.mxu0 %v1886
        %v1888 = vpop.f32.mrf.mxu0
        %v1889 = vadd.f32 %v1792, %v1888
        %v1890 = vand.u32 %v1124, 4294901760
        %1891 = vmatmul.f32.gmra.mxu0 %v1890
        %v1892 = vpop.f32.mrf.mxu0
        %v1893 = vadd.f32 %v1796, %v1892
        %v1894 = vand.u32 %v1125, 4294901760
        %1895 = vmatmul.f32.gmra.mxu0 %v1894
        %v1896 = vpop.f32.mrf.mxu0
        %v1897 = vadd.f32 %v1800, %v1896
        %v1898 = vand.u32 %v1126, 4294901760
        %1899 = vmatmul.f32.gmra.mxu0 %v1898
        %v1900 = vpop.f32.mrf.mxu0
        %v1901 = vadd.f32 %v1804, %v1900
        %v1902 = vand.u32 %v1127, 4294901760
        %1903 = vmatmul.f32.gmra.mxu0 %v1902
        %v1904 = vpop.f32.mrf.mxu0
        %v1905 = vadd.f32 %v1808, %v1904
        %v1906 = vand.u32 %v1128, 4294901760
        %1907 = vmatmul.f32.gmra.mxu0 %v1906
        %v1908 = vpop.f32.mrf.mxu0
        %v1909 = vadd.f32 %v1812, %v1908
        %v1910 = vand.u32 %v1129, 4294901760
        %1911 = vmatmul.f32.gmra.mxu0 %v1910
        %v1912 = vpop.f32.mrf.mxu0
        %v1913 = vadd.f32 %v1816, %v1912
        %v1914 = vand.u32 %v1130, 4294901760
        %1915 = vmatmul.f32.gmra.mxu0 %v1914
        %v1916 = vpop.f32.mrf.mxu0
        %v1917 = vadd.f32 %v1820, %v1916
        %v1918 = vand.u32 %v1131, 4294901760
        %1919 = vmatmul.f32.gmra.mxu0 %v1918
        %v1920 = vpop.f32.mrf.mxu0
        %v1921 = vadd.f32 %v1824, %v1920
        %v1922 = vand.u32 %v1132, 4294901760
        %1923 = vmatmul.f32.gmra.mxu0 %v1922
        %v1924 = vpop.f32.mrf.mxu0
        %v1925 = vadd.f32 %v1828, %v1924
        %v1926 = vand.u32 %v1133, 4294901760
        %1927 = vmatmul.f32.gmra.mxu0 %v1926
        %v1928 = vpop.f32.mrf.mxu0
        %v1929 = vadd.f32 %v1832, %v1928
        %v1930 = vand.u32 %v1134, 4294901760
        %1931 = vmatmul.f32.gmra.mxu0 %v1930
        %v1932 = vpop.f32.mrf.mxu0
        %v1933 = vadd.f32 %v1836, %v1932
        %v1934 = vand.u32 %v1135, 4294901760
        %1935 = vmatmul.f32.gmra.mxu0 %v1934
        %v1936 = vpop.f32.mrf.mxu0
        %v1937 = vadd.f32 %v1840, %v1936
        %v1938 = vand.u32 %v1136, 4294901760
        %1939 = vmatmul.f32.gmra.mxu0 %v1938
        %v1940 = vpop.f32.mrf.mxu0
        %v1941 = vadd.f32 %v1844, %v1940
        %1942 = vdwg.mxu0
        %v1943 = vmul.f32 %v1881, 0.015625
        %v1944 = vmul.f32 %v1885, 0.015625
        %v1945 = vmul.f32 %v1889, 0.015625
        %v1946 = vmul.f32 %v1893, 0.015625
        %v1947 = vmul.f32 %v1897, 0.015625
        %v1948 = vmul.f32 %v1901, 0.015625
        %v1949 = vmul.f32 %v1905, 0.015625
        %v1950 = vmul.f32 %v1909, 0.015625
        %v1951 = vmul.f32 %v1913, 0.015625
        %v1952 = vmul.f32 %v1917, 0.015625
        %v1953 = vmul.f32 %v1921, 0.015625
        %v1954 = vmul.f32 %v1925, 0.015625
        %v1955 = vmul.f32 %v1929, 0.015625
        %v1956 = vmul.f32 %v1933, 0.015625
        %v1957 = vmul.f32 %v1937, 0.015625
        %v1958 = vmul.f32 %v1941, 0.015625
        %v1959 = vadd.f32 %v1943, 1e-05
        %v1960 = vadd.f32 %v1944, 1e-05
        %v1961 = vadd.f32 %v1945, 1e-05
        %v1962 = vadd.f32 %v1946, 1e-05
        %v1963 = vadd.f32 %v1947, 1e-05
        %v1964 = vadd.f32 %v1948, 1e-05
        %v1965 = vadd.f32 %v1949, 1e-05
        %v1966 = vadd.f32 %v1950, 1e-05
        %v1967 = vadd.f32 %v1951, 1e-05
        %v1968 = vadd.f32 %v1952, 1e-05
        %v1969 = vadd.f32 %v1953, 1e-05
        %v1970 = vadd.f32 %v1954, 1e-05
        %v1971 = vadd.f32 %v1955, 1e-05
        %v1972 = vadd.f32 %v1956, 1e-05
        %v1973 = vadd.f32 %v1957, 1e-05
        %v1974 = vadd.f32 %v1958, 1e-05
        %v1975 = vrsqrt.pop %v1959
        %v1976 = vmul.f32 %v1975, %v1959
        %v1977 = vmul.f32 %v1976, %v1975
        %v1978 = vmul.f32 0.5, %v1977
        %v1979 = vsub.f32 1.5, %v1978
        %v1980 = vmul.f32 %v1975, %v1979
        %vm1981 = vweird.f32 %v1959
        %vm1982 = vweird.f32 %v1975
        %vm1983 = vmor %vm1981, %vm1982
        %v1984 = vsel %vm1983, %v1975, %v1980
        %v1985 = vrsqrt.pop %v1960
        %v1986 = vmul.f32 %v1985, %v1960
        %v1987 = vmul.f32 %v1986, %v1985
        %v1988 = vmul.f32 0.5, %v1987
        %v1989 = vsub.f32 1.5, %v1988
        %v1990 = vmul.f32 %v1985, %v1989
        %vm1991 = vweird.f32 %v1960
        %vm1992 = vweird.f32 %v1985
        %vm1993 = vmor %vm1991, %vm1992
        %v1994 = vsel %vm1993, %v1985, %v1990
        %v1995 = vrsqrt.pop %v1961
        %v1996 = vmul.f32 %v1995, %v1961
        %v1997 = vmul.f32 %v1996, %v1995
        %v1998 = vmul.f32 0.5, %v1997
        %v1999 = vsub.f32 1.5, %v1998
        %v2000 = vmul.f32 %v1995, %v1999
        %vm2001 = vweird.f32 %v1961
        %vm2002 = vweird.f32 %v1995
        %vm2003 = vmor %vm2001, %vm2002
        %v2004 = vsel %vm2003, %v1995, %v2000
        %v2005 = vrsqrt.pop %v1962
        %v2006 = vmul.f32 %v2005, %v1962
        %v2007 = vmul.f32 %v2006, %v2005
        %v2008 = vmul.f32 0.5, %v2007
        %v2009 = vsub.f32 1.5, %v2008
        %v2010 = vmul.f32 %v2005, %v2009
        %vm2011 = vweird.f32 %v1962
        %vm2012 = vweird.f32 %v2005
        %vm2013 = vmor %vm2011, %vm2012
        %v2014 = vsel %vm2013, %v2005, %v2010
        %v2015 = vrsqrt.pop %v1963
        %v2016 = vmul.f32 %v2015, %v1963
        %v2017 = vmul.f32 %v2016, %v2015
        %v2018 = vmul.f32 0.5, %v2017
        %v2019 = vsub.f32 1.5, %v2018
        %v2020 = vmul.f32 %v2015, %v2019
        %vm2021 = vweird.f32 %v1963
        %vm2022 = vweird.f32 %v2015
        %vm2023 = vmor %vm2021, %vm2022
        %v2024 = vsel %vm2023, %v2015, %v2020
        %v2025 = vrsqrt.pop %v1964
        %v2026 = vmul.f32 %v2025, %v1964
        %v2027 = vmul.f32 %v2026, %v2025
        %v2028 = vmul.f32 0.5, %v2027
        %v2029 = vsub.f32 1.5, %v2028
        %v2030 = vmul.f32 %v2025, %v2029
        %vm2031 = vweird.f32 %v1964
        %vm2032 = vweird.f32 %v2025
        %vm2033 = vmor %vm2031, %vm2032
        %v2034 = vsel %vm2033, %v2025, %v2030
        %v2035 = vrsqrt.pop %v1965
        %v2036 = vmul.f32 %v2035, %v1965
        %v2037 = vmul.f32 %v2036, %v2035
        %v2038 = vmul.f32 0.5, %v2037
        %v2039 = vsub.f32 1.5, %v2038
        %v2040 = vmul.f32 %v2035, %v2039
        %vm2041 = vweird.f32 %v1965
        %vm2042 = vweird.f32 %v2035
        %vm2043 = vmor %vm2041, %vm2042
        %v2044 = vsel %vm2043, %v2035, %v2040
        %v2045 = vrsqrt.pop %v1966
        %v2046 = vmul.f32 %v2045, %v1966
        %v2047 = vmul.f32 %v2046, %v2045
        %v2048 = vmul.f32 0.5, %v2047
        %v2049 = vsub.f32 1.5, %v2048
        %v2050 = vmul.f32 %v2045, %v2049
        %vm2051 = vweird.f32 %v1966
        %vm2052 = vweird.f32 %v2045
        %vm2053 = vmor %vm2051, %vm2052
        %v2054 = vsel %vm2053, %v2045, %v2050
        %v2055 = vrsqrt.pop %v1967
        %v2056 = vmul.f32 %v2055, %v1967
        %v2057 = vmul.f32 %v2056, %v2055
        %v2058 = vmul.f32 0.5, %v2057
        %v2059 = vsub.f32 1.5, %v2058
        %v2060 = vmul.f32 %v2055, %v2059
        %vm2061 = vweird.f32 %v1967
        %vm2062 = vweird.f32 %v2055
        %vm2063 = vmor %vm2061, %vm2062
        %v2064 = vsel %vm2063, %v2055, %v2060
        %v2065 = vrsqrt.pop %v1968
        %v2066 = vmul.f32 %v2065, %v1968
        %v2067 = vmul.f32 %v2066, %v2065
        %v2068 = vmul.f32 0.5, %v2067
        %v2069 = vsub.f32 1.5, %v2068
        %v2070 = vmul.f32 %v2065, %v2069
        %vm2071 = vweird.f32 %v1968
        %vm2072 = vweird.f32 %v2065
        %vm2073 = vmor %vm2071, %vm2072
        %v2074 = vsel %vm2073, %v2065, %v2070
        %v2075 = vrsqrt.pop %v1969
        %v2076 = vmul.f32 %v2075, %v1969
        %v2077 = vmul.f32 %v2076, %v2075
        %v2078 = vmul.f32 0.5, %v2077
        %v2079 = vsub.f32 1.5, %v2078
        %v2080 = vmul.f32 %v2075, %v2079
        %vm2081 = vweird.f32 %v1969
        %vm2082 = vweird.f32 %v2075
        %vm2083 = vmor %vm2081, %vm2082
        %v2084 = vsel %vm2083, %v2075, %v2080
        %v2085 = vrsqrt.pop %v1970
        %v2086 = vmul.f32 %v2085, %v1970
        %v2087 = vmul.f32 %v2086, %v2085
        %v2088 = vmul.f32 0.5, %v2087
        %v2089 = vsub.f32 1.5, %v2088
        %v2090 = vmul.f32 %v2085, %v2089
        %vm2091 = vweird.f32 %v1970
        %vm2092 = vweird.f32 %v2085
        %vm2093 = vmor %vm2091, %vm2092
        %v2094 = vsel %vm2093, %v2085, %v2090
        %v2095 = vrsqrt.pop %v1971
        %v2096 = vmul.f32 %v2095, %v1971
        %v2097 = vmul.f32 %v2096, %v2095
        %v2098 = vmul.f32 0.5, %v2097
        %v2099 = vsub.f32 1.5, %v2098
        %v2100 = vmul.f32 %v2095, %v2099
        %vm2101 = vweird.f32 %v1971
        %vm2102 = vweird.f32 %v2095
        %vm2103 = vmor %vm2101, %vm2102
        %v2104 = vsel %vm2103, %v2095, %v2100
        %v2105 = vrsqrt.pop %v1972
        %v2106 = vmul.f32 %v2105, %v1972
        %v2107 = vmul.f32 %v2106, %v2105
        %v2108 = vmul.f32 0.5, %v2107
        %v2109 = vsub.f32 1.5, %v2108
        %v2110 = vmul.f32 %v2105, %v2109
        %vm2111 = vweird.f32 %v1972
        %vm2112 = vweird.f32 %v2105
        %vm2113 = vmor %vm2111, %vm2112
        %v2114 = vsel %vm2113, %v2105, %v2110
        %v2115 = vrsqrt.pop %v1973
        %v2116 = vmul.f32 %v2115, %v1973
        %v2117 = vmul.f32 %v2116, %v2115
        %v2118 = vmul.f32 0.5, %v2117
        %v2119 = vsub.f32 1.5, %v2118
        %v2120 = vmul.f32 %v2115, %v2119
        %vm2121 = vweird.f32 %v1973
        %vm2122 = vweird.f32 %v2115
        %vm2123 = vmor %vm2121, %vm2122
        %v2124 = vsel %vm2123, %v2115, %v2120
        %v2125 = vrsqrt.pop %v1974
        %v2126 = vmul.f32 %v2125, %v1974
        %v2127 = vmul.f32 %v2126, %v2125
        %v2128 = vmul.f32 0.5, %v2127
        %v2129 = vsub.f32 1.5, %v2128
        %v2130 = vmul.f32 %v2125, %v2129
        %vm2131 = vweird.f32 %v1974
        %vm2132 = vweird.f32 %v2125
        %vm2133 = vmor %vm2131, %vm2132
        %v2134 = vsel %vm2133, %v2125, %v2130
        %v2135 = vmul.f32 %v1105, %v1984
        %v2136 = vmul.f32 %v1106, %v1994
        %v2137 = vmul.f32 %v1107, %v2004
        %v2138 = vmul.f32 %v1108, %v2014
        %v2139 = vmul.f32 %v1109, %v2024
        %v2140 = vmul.f32 %v1110, %v2034
        %v2141 = vmul.f32 %v1111, %v2044
        %v2142 = vmul.f32 %v1112, %v2054
        %v2143 = vmul.f32 %v1113, %v2064
        %v2144 = vmul.f32 %v1114, %v2074
        %v2145 = vmul.f32 %v1115, %v2084
        %v2146 = vmul.f32 %v1116, %v2094
        %v2147 = vmul.f32 %v1117, %v2104
        %v2148 = vmul.f32 %v1118, %v2114
        %v2149 = vmul.f32 %v1119, %v2124
        %v2150 = vmul.f32 %v1120, %v2134
        %v2151 = vld [vmem:[#allocation5] sm:$0x1]
        %v2153 = vperm.slane %v2151, 0
        %v2155 = vmul.f32 %v2135, %v2153
        %v2156 = vmul.f32 %v2136, %v2153
        %v2157 = vmul.f32 %v2137, %v2153
        %v2158 = vmul.f32 %v2138, %v2153
        %v2159 = vmul.f32 %v2139, %v2153
        %v2160 = vmul.f32 %v2140, %v2153
        %v2161 = vmul.f32 %v2141, %v2153
        %v2162 = vmul.f32 %v2142, %v2153
        %v2163 = vmul.f32 %v2143, %v2153
        %v2164 = vmul.f32 %v2144, %v2153
        %v2165 = vmul.f32 %v2145, %v2153
        %v2166 = vmul.f32 %v2146, %v2153
        %v2167 = vmul.f32 %v2147, %v2153
        %v2168 = vmul.f32 %v2148, %v2153
        %v2169 = vmul.f32 %v2149, %v2153
        %v2170 = vmul.f32 %v2150, %v2153
        %v2171 = vld [vmem:[%s2] sm:$0x1]
        %v2173 = vperm.slane %v2171, 0
        %v2175 = vadd.f32 %v2155, %v2173
        %v2176 = vadd.f32 %v2156, %v2173
        %v2177 = vadd.f32 %v2157, %v2173
        %v2178 = vadd.f32 %v2158, %v2173
        %v2179 = vadd.f32 %v2159, %v2173
        %v2180 = vadd.f32 %v2160, %v2173
        %v2181 = vadd.f32 %v2161, %v2173
        %v2182 = vadd.f32 %v2162, %v2173
        %v2183 = vadd.f32 %v2163, %v2173
        %v2184 = vadd.f32 %v2164, %v2173
        %v2185 = vadd.f32 %v2165, %v2173
        %v2186 = vadd.f32 %v2166, %v2173
        %v2187 = vadd.f32 %v2167, %v2173
        %v2188 = vadd.f32 %v2168, %v2173
        %v2189 = vadd.f32 %v2169, %v2173
        %v2190 = vadd.f32 %v2170, %v2173
        %2191 = vst [vmem:[%s248] sm:$0xff] %v2175
        %2192 = vst [vmem:[%s248 + $0x8] sm:$0xff] %v2176
        %2193 = vst [vmem:[%s248 + $0x10] sm:$0xff] %v2177
        %2194 = vst [vmem:[%s248 + $0x18] sm:$0xff] %v2178
        %2195 = vst [vmem:[%s248 + $0x20] sm:$0xff] %v2179
        %2196 = vst [vmem:[%s248 + $0x28] sm:$0xff] %v2180
        %2197 = vst [vmem:[%s248 + $0x30] sm:$0xff] %v2181
        %2198 = vst [vmem:[%s248 + $0x38] sm:$0xff] %v2182
        %2199 = vst [vmem:[%s248 + $0x40] sm:$0xff] %v2183
        %2200 = vst [vmem:[%s248 + $0x48] sm:$0xff] %v2184
        %2201 = vst [vmem:[%s248 + $0x50] sm:$0xff] %v2185
        %2202 = vst [vmem:[%s248 + $0x58] sm:$0xff] %v2186
        %2203 = vst [vmem:[%s248 + $0x60] sm:$0xff] %v2187
        %2204 = vst [vmem:[%s248 + $0x68] sm:$0xff] %v2188
        %2205 = vst [vmem:[%s248 + $0x70] sm:$0xff] %v2189
        %2206 = vst [vmem:[%s248 + $0x78] sm:$0xff] %v2190
        %s2207 = sand.u32 %s119, 1
        %s2208 = scalar_lea.sflag [#allocation4], %s2207
        %s2209 = sand.u32 %s119, 1
        %s2210 = smul.addr %s2209, 128
        %s2211 = scalar_lea.vmem [#allocation8], %s2210
        // Predicated region
        $region49: #{tpu_custom_call.1} parent=35 // pred_check
          %p2212 = pneg %p129
        $region50: #{tpu_custom_call.1} parent=35 // pred_check_branch
          %2214 = sbr.rel (%p2212) target = $region52
        $region51: #{tpu_custom_call.1} parent=35 // pred_region
          %s2215 = smul.u32 16, %s22
          %2217 = vsyncadd %s2208, 0
          %s2218 = smul.addr %s2215, 8
          %s2219 = scalar_lea.hbm %s4, %s2218
          %s2220 = sshll.u32 %s2211, 4
          %s2221 = int_to_ptr.vmem [resolvable:$true] %s2220
          %s2222 = sshll.u32 %s2219, 4
          %s2223 = int_to_ptr.hbm [resolvable:$true] %s2222
          %2228 = dma.vmem_to_hbm [thread:$0]  %s2221, 2048, %s2223, %s2208, 128, 128, 8
        $region52: #{tpu_custom_call.1} parent=35 // pred_fallthru
          _
      $region36: #{tpu_custom_call.1} parent=5 // pred_fallthru
        _
      %p2229 = scmp.le.s32.totalorder 2, %s17
      // Predicated region
      $region53: #{tpu_custom_call.1} parent=5 // pred_check
        %p2230 = pneg %p2229
      $region54: #{tpu_custom_call.1} parent=5 // pred_check_branch
        %2232 = sbr.rel (%p2230) target = $region56
      $region55: #{tpu_custom_call.1} parent=5 // pred_region
        %s2233 = ssub.s32 %s17, 2
        // Predicated region
        $region57: #{tpu_custom_call.1} parent=55 // pred_check
          %p2234 = pneg %p135
        $region58: #{tpu_custom_call.1} parent=55 // pred_check_branch
          %2236 = sbr.rel (%p2234) target = $region60
        $region59: #{tpu_custom_call.1} parent=55 // pred_region
          %s2237 = sand.u32 %s120, 1
          %s2238 = scalar_lea.sflag [#allocation4], %s2237
          %s2239 = sand.u32 %s120, 1
          %s2240 = smul.addr %s2239, 128
          %s2241 = scalar_lea.vmem [#allocation8], %s2240
          %2243 = dma.done %s2238, 2048
        $region60: #{tpu_custom_call.1} parent=55 // pred_fallthru
          _
      $region56: #{tpu_custom_call.1} parent=5 // pred_fallthru
        _
    $region6: #{tpu_custom_call.1} parent=1 // loop_footer
      %s21 = sadd.s32 1, %s17
    $region7: #{tpu_custom_call.1} parent=1 // loop_footer_branch
      %16 = sbr.rel target = $region3
    $region8: #{tpu_custom_call.1} parent=1 // loop_exit
      _
    %2244 = vsyncpa [#allocation3], 1
    %s2245 = scalar_lea.sflag [#allocation3], 1
    %2246 = vsyncpa %s2245, 1
    %2247 = vsyncpa [#allocation6], 1
    %2248 = vsyncpa [#allocation4], 1
    %s2249 = scalar_lea.sflag [#allocation4], 1
    %2250 = vsyncpa %s2249, 1

</llo_original>
